<compile_context>
chip_gen: v7x
topology: tpu7x:2x2x1
jax: 0.10.0
libtpu: 0.0.40
codegen_flags: <defaults>
</compile_context>

<pallas_src>
import functools

import jax
import jax.numpy as jnp
from jax.experimental import pallas as pl
from jax.experimental.pallas import tpu as pltpu


# ----------------------------- config ---------------------------------------
class GPT2Config:
    d_vocab = 128
    d_embedding = 32
    d_head = 8
    num_heads = 4
    d_mlp = 128
    num_blocks = 2
    context_window = 16
    layer_norm_epsilon = 1e-5
    initialized_std_range = 0.02
    activation_recomputation = False  # forward semantics unaffected


# --------------------------- math helpers ------------------------------------
def _layer_norm(x, w, b, eps):
    mu = jnp.mean(x, axis=-1, keepdims=True)
    xc = x - mu
    var = jnp.mean(xc * xc, axis=-1, keepdims=True)
    return xc * jax.lax.rsqrt(var + eps) * w + b


def _gelu(x):
    # GPT-2 "gelu_new" (tanh approximation)
    c = jnp.sqrt(jnp.float32(2.0 / jnp.pi))
    return 0.5 * x * (1.0 + jnp.tanh(c * (x + 0.044715 * x * x * x)))


# ----------------------------- fused kernel ----------------------------------
def gpt2_fused_kernel(
        # layer-independent inputs (resident across the layer grid)
        x_ref, lhsmask_ref, amask_ref, lnf_w_ref, lnf_b_ref, w_u_ref, b_u_ref,
        # per-layer (stacked) weights, indexed by the layer grid axis
        ln1_w_ref, ln1_b_ref, wq_ref, bq_ref, wk_ref, bk_ref, wvo_ref, bo_ref,
        ln2_w_ref, ln2_b_ref, w_in_ref, b_in_ref, w_out_ref, b_out_ref,
        # output + scratch
        out_ref, resid_ref,
        *, num_heads, eps):
    layer = pl.program_id(0)
    H = num_heads

    @pl.when(layer == 0)
    def _():
        resid_ref[...] = x_ref[...]

    x = resid_ref[...]                      # (BT, D) residual, VMEM-resident
    BT, D = x.shape

    # ---- attention sub-block (pre-LN), all heads via full-width matmuls ----
    xn = _layer_norm(x, ln1_w_ref[0], ln1_b_ref[0], eps)
    # Block-diagonal expansion: lhs[h*BT + n, h'*D + d] = xn[n, d] * (h == h').
    lhs = jnp.concatenate([xn] * H, axis=0)              # (H*BT, D)
    lhs = jnp.concatenate([lhs] * H, axis=1)             # (H*BT, H*D)
    lhs = lhs * lhsmask_ref[...]

    # Head-major projections (weights repacked in the wrapper; 1/sqrt(d_head)
    # folded into wq/bq and W_O folded into the value projection wvo).
    q = jnp.dot(lhs, wq_ref[0], preferred_element_type=jnp.float32) + bq_ref[0]
    k = jnp.dot(lhs, wk_ref[0], preferred_element_type=jnp.float32) + bk_ref[0]
    vproj = jnp.dot(lhs, wvo_ref[0], preferred_element_type=jnp.float32)

    # All (head, batch) scores in one matmul; amask adds -1e30 everywhere the
    # causal / same-(head, batch) block structure forbids attention.
    s = jax.lax.dot_general(q, k, (((1,), (1,)), ((), ())),
                            preferred_element_type=jnp.float32)   # (H*BT, H*BT)
    s = s + amask_ref[...]
    s = s - jnp.max(s, axis=-1, keepdims=True)
    p = jnp.exp(s)
    denom = jnp.sum(p, axis=-1, keepdims=True)
    ctx = jnp.dot(p, vproj, preferred_element_type=jnp.float32)   # (H*BT, D)
    ctx = ctx * pl.reciprocal(denom, approx=True)                 # EUP slot
    # Combine the H per-head partial outputs (H row-blocks of BT rows): adds.
    attn = ctx[0:BT]
    for h in range(1, H):
        attn = attn + ctx[h * BT:(h + 1) * BT]
    x = x + attn + bo_ref[0]          # bo = b_o + b_v @ W_O (folded in wrapper)

    # ---- MLP sub-block (pre-LN) ----
    xn2 = _layer_norm(x, ln2_w_ref[0], ln2_b_ref[0], eps)
    h1 = jnp.dot(xn2, w_in_ref[0],
                 preferred_element_type=jnp.float32) + b_in_ref[0]
    h1 = _gelu(h1)
    x = x + jnp.dot(h1, w_out_ref[0],
                    preferred_element_type=jnp.float32) + b_out_ref[0]
    resid_ref[...] = x

    # ---- final LayerNorm + unembed, emitted on the last layer only ----
    @pl.when(layer == pl.num_programs(0) - 1)
    def _():
        xf = _layer_norm(x, lnf_w_ref[...], lnf_b_ref[...], eps)
        out_ref[...] = jnp.dot(xf, w_u_ref[...],
                               preferred_element_type=jnp.float32) + b_u_ref[...]


# ------------------------------ wrappers --------------------------------------
def _const_spec(arr):
    nd = arr.ndim
    return pl.BlockSpec(tuple(arr.shape), lambda layer, _nd=nd: (0,) * _nd)


def _layer_spec(arr):
    nd = arr.ndim
    return pl.BlockSpec((1,) + tuple(arr.shape[1:]),
                        lambda layer, _nd=nd: (layer,) + (0,) * (_nd - 1))


def _prep_block(blk, *, D, H, dh, BT):
    """Wrapper-side layout plumbing: head-major weight repacking + folding."""
    inv_sqrt_dh = 1.0 / float(dh) ** 0.5
    w_qkv, b_qkv = blk["w_qkv"], blk["b_qkv"][0]
    w_q, w_k, w_v = w_qkv[:, :D], w_qkv[:, D:2 * D], w_qkv[:, 2 * D:]
    b_q, b_k, b_v = b_qkv[:D], b_qkv[D:2 * D], b_qkv[2 * D:]
    w_o, b_o = blk["w_o"], blk["b_o"]

    def head_major(w):                               # (D, H*dh) -> (H*D, dh)
        return w.reshape(D, H, dh).transpose(1, 0, 2).reshape(H * D, dh)

    # Fold the per-head output projection into the value projection:
    #   wvo[h*D + din, e] = sum_d w_v[din, h*dh + d] * w_o[h*dh + d, e]
    wvo = jnp.einsum("dhe,hef->hdf", w_v.reshape(D, H, dh),
                     w_o.reshape(H, dh, D)).reshape(H * D, D)
    return {
        "ln1_w": blk["ln1_w"], "ln1_b": blk["ln1_b"],
        "wq": head_major(w_q) * inv_sqrt_dh,
        "bq": jnp.repeat(b_q.reshape(H, dh) * inv_sqrt_dh, BT, axis=0),
        "wk": head_major(w_k),
        "bk": jnp.repeat(b_k.reshape(H, dh), BT, axis=0),
        "wvo": wvo,
        "bo": b_o + (b_v @ w_o)[None, :],   # softmax rows sum to 1 -> exact
        "ln2_w": blk["ln2_w"], "ln2_b": blk["ln2_b"],
        "w_in": blk["w_in"], "b_in": blk["b_in"],
        "w_out": blk["w_out"], "b_out": blk["b_out"],
    }


_LAYER_KEYS = ("ln1_w", "ln1_b", "wq", "bq", "wk", "bk", "wvo", "bo",
               "ln2_w", "ln2_b", "w_in", "b_in", "w_out", "b_out")


def gpt2_forward(tokens, params, cfg):
    B, T = tokens.shape
    D, H, dh = cfg.d_embedding, cfg.num_heads, cfg.d_head
    V, L = cfg.d_vocab, cfg.num_blocks
    BT = B * T

    # Embedding gather + positional embedding (glue, plain JAX).
    x = jnp.take(params["W_E"], tokens, axis=0) + params["W_pos"][:T][None]
    x = x.reshape(BT, D).astype(jnp.float32)

    # Per-layer weight repacking, stacked on a leading layer axis.
    preps = [_prep_block(blk, D=D, H=H, dh=dh, BT=BT)
             for blk in params["blocks"]]
    stacked = {k: jnp.stack([p[k] for p in preps], axis=0) for k in _LAYER_KEYS}

    # Constant masks (same for every layer, resident in VMEM).
    r = jnp.arange(H * BT)
    same_block = (r // T)[:, None] == (r // T)[None, :]   # same (head, batch)
    causal = (r % T)[None, :] <= (r % T)[:, None]
    attn_bias = jnp.where(same_block & causal, 0.0, -1e30).astype(jnp.float32)
    head_row = jnp.arange(H * BT) // BT
    head_col = jnp.arange(H * D) // D
    lhs_mask = (head_row[:, None] == head_col[None, :]).astype(jnp.float32)

    const_inputs = [x, lhs_mask, attn_bias, params["lnf_w"], params["lnf_b"],
                    params["W_U"], params["b_U"]]
    layer_inputs = [stacked[k] for k in _LAYER_KEYS]

    kernel = functools.partial(gpt2_fused_kernel, num_heads=H,
                               eps=cfg.layer_norm_epsilon)
    # TODO(synk): at real GPT-2 scale, add a leading "parallel" batch/sequence
    # grid axis (v7x has 2 TCs/chip) and feed bf16 operands to the MXU on
    # v6e/v7x; kept f32 + layer-only grid at this toy size.
    logits = pl.pallas_call(
        kernel,
        out_shape=jax.ShapeDtypeStruct((BT, V), jnp.float32),
        grid=(L,),
        in_specs=[_const_spec(a) for a in const_inputs] +
                 [_layer_spec(a) for a in layer_inputs],
        out_specs=pl.BlockSpec((BT, V), lambda layer: (0, 0)),
        scratch_shapes=[pltpu.VMEM((BT, D), jnp.float32)],
        compiler_params=pltpu.CompilerParams(
            dimension_semantics=("arbitrary",)),
    )(*const_inputs, *layer_inputs)
    return logits.reshape(B, T, V)


# --------------------------- pure-JAX reference --------------------------------
def gpt2_reference(tokens, params, cfg):
    T = tokens.shape[1]
    x = jnp.take(params["W_E"], tokens, axis=0) + params["W_pos"][:T][None]
    D, H, dh = cfg.d_embedding, cfg.num_heads, cfg.d_head
    for p in params["blocks"]:
        xn = _layer_norm(x, p["ln1_w"], p["ln1_b"], cfg.layer_norm_epsilon)
        qkv = xn @ p["w_qkv"] + p["b_qkv"]
        q = qkv[..., :D].reshape(-1, T, H, dh)
        k = qkv[..., D:2 * D].reshape(-1, T, H, dh)
        v = qkv[..., 2 * D:].reshape(-1, T, H, dh)
        s = jnp.einsum("bqhd,bkhd->bhqk", q, k) / jnp.sqrt(jnp.float32(dh))
        mask = jnp.tril(jnp.ones((T, T), dtype=bool))
        s = jnp.where(mask[None, None], s, -1e30)
        pattn = jax.nn.softmax(s, axis=-1)
        z = jnp.einsum("bhqk,bkhd->bqhd", pattn, v).reshape(-1, T, D)
        x = x + z @ p["w_o"] + p["b_o"]
        xn2 = _layer_norm(x, p["ln2_w"], p["ln2_b"], cfg.layer_norm_epsilon)
        h1 = _gelu(xn2 @ p["w_in"] + p["b_in"])
        x = x + h1 @ p["w_out"] + p["b_out"]
    xn = _layer_norm(x, params["lnf_w"], params["lnf_b"],
                     cfg.layer_norm_epsilon)
    return xn @ params["W_U"] + params["b_U"]


# ------------------------------ param init ------------------------------------
def init_params(cfg, key):
    # Biases / LN affine params get small random values (instead of the usual
    # zeros/ones) purely so the correctness check exercises every folded path.
    std = cfg.initialized_std_range
    D, V, M = cfg.d_embedding, cfg.d_vocab, cfg.d_mlp
    n_keys = 6 + 12 * cfg.num_blocks
    keys = jax.random.split(key, n_keys)
    ki = iter(range(n_keys))

    def nrm(shape):
        return (std * jax.random.normal(keys[next(ki)], shape)).astype(jnp.float32)

    def one_plus(shape):
        return (1.0 + std * jax.random.normal(keys[next(ki)], shape)).astype(jnp.float32)

    params = {
        "W_E": nrm((V, D)),
        "W_pos": nrm((cfg.context_window, D)),
        "W_U": nrm((D, V)),
        "b_U": nrm((1, V)),
        "lnf_w": one_plus((1, D)),
        "lnf_b": nrm((1, D)),
        "blocks": [],
    }
    for _ in range(cfg.num_blocks):
        params["blocks"].append({
            "ln1_w": one_plus((1, D)),
            "ln1_b": nrm((1, D)),
            "w_qkv": nrm((D, 3 * D)),
            "b_qkv": nrm((1, 3 * D)),
            "w_o": nrm((D, D)),
            "b_o": nrm((1, D)),
            "ln2_w": one_plus((1, D)),
            "ln2_b": nrm((1, D)),
            "w_in": nrm((D, M)),
            "b_in": nrm((1, M)),
            "w_out": nrm((M, D)),
            "b_out": nrm((1, D)),
        })
    return params


# --------------------------------- main ----------------------------------------
if __name__ == "__main__":
    cfg = GPT2Config()
    key = jax.random.PRNGKey(0)
    k_tok, k_params = jax.random.split(key)

    batch, seq = 2, 8
    tokens = jax.random.randint(k_tok, (batch, seq), 0, cfg.d_vocab,
                                dtype=jnp.int32)
    params = init_params(cfg, k_params)

    logits = jax.block_until_ready(gpt2_forward(tokens, params, cfg))
    ref = jax.block_until_ready(gpt2_reference(tokens, params, cfg))

    assert logits.shape == (batch, seq, cfg.d_vocab)
    max_err = float(jnp.max(jnp.abs(logits - ref)))
    # approx reciprocal in the softmax denominator -> slightly loosened tol.
    assert jnp.allclose(logits, ref, rtol=2e-3, atol=2e-3), max_err

    print("KERNEL_OK")
</pallas_src>

<mosaic_0001>
module attributes {stable_mosaic.version = 11 : i64} {
  func.func @gpt2_fused_kernel(%arg0: i32, %arg1: memref<16x32xf32, #tpu.memory_space<vmem>>, %arg2: memref<64x128xf32, #tpu.memory_space<vmem>>, %arg3: memref<64x64xf32, #tpu.memory_space<vmem>>, %arg4: memref<1x32xf32, #tpu.memory_space<vmem>>, %arg5: memref<1x32xf32, #tpu.memory_space<vmem>>, %arg6: memref<32x128xf32, #tpu.memory_space<vmem>>, %arg7: memref<1x128xf32, #tpu.memory_space<vmem>>, %arg8: memref<1x1x32xf32, #tpu.memory_space<vmem>>, %arg9: memref<1x1x32xf32, #tpu.memory_space<vmem>>, %arg10: memref<1x128x8xf32, #tpu.memory_space<vmem>>, %arg11: memref<1x64x8xf32, #tpu.memory_space<vmem>>, %arg12: memref<1x128x8xf32, #tpu.memory_space<vmem>>, %arg13: memref<1x64x8xf32, #tpu.memory_space<vmem>>, %arg14: memref<1x128x32xf32, #tpu.memory_space<vmem>>, %arg15: memref<1x1x32xf32, #tpu.memory_space<vmem>>, %arg16: memref<1x1x32xf32, #tpu.memory_space<vmem>>, %arg17: memref<1x1x32xf32, #tpu.memory_space<vmem>>, %arg18: memref<1x32x128xf32, #tpu.memory_space<vmem>>, %arg19: memref<1x1x128xf32, #tpu.memory_space<vmem>>, %arg20: memref<1x128x32xf32, #tpu.memory_space<vmem>>, %arg21: memref<1x1x32xf32, #tpu.memory_space<vmem>>, %arg22: memref<16x128xf32, #tpu.memory_space<vmem>>, %arg23: memref<16x32xf32, #tpu.memory_space<vmem>>) attributes {dimension_semantics = [#tpu.dimension_semantics<arbitrary>], iteration_bounds = array<i64: 2>, scalar_prefetch = 0 : i64, scratch_operands = 1 : i64, tpu.core_type = #tpu.core_type<tc>, window_params = [{pipeline_mode = #tpu.pipeline_mode<synchronous>, transform_indices = @transform_0, window_bounds = array<i64: 16, 32>}, {pipeline_mode = #tpu.pipeline_mode<synchronous>, transform_indices = @transform_1, window_bounds = array<i64: 64, 128>}, {pipeline_mode = #tpu.pipeline_mode<synchronous>, transform_indices = @transform_2, window_bounds = array<i64: 64, 64>}, {pipeline_mode = #tpu.pipeline_mode<synchronous>, transform_indices = @transform_3, window_bounds = array<i64: 1, 32>}, {pipeline_mode = #tpu.pipeline_mode<synchronous>, transform_indices = @transform_4, window_bounds = array<i64: 1, 32>}, {pipeline_mode = #tpu.pipeline_mode<synchronous>, transform_indices = @transform_5, window_bounds = array<i64: 32, 128>}, {pipeline_mode = #tpu.pipeline_mode<synchronous>, transform_indices = @transform_6, window_bounds = array<i64: 1, 128>}, {transform_indices = @transform_7, window_bounds = array<i64: 1, 1, 32>}, {transform_indices = @transform_8, window_bounds = array<i64: 1, 1, 32>}, {transform_indices = @transform_9, window_bounds = array<i64: 1, 128, 8>}, {transform_indices = @transform_10, window_bounds = array<i64: 1, 64, 8>}, {transform_indices = @transform_11, window_bounds = array<i64: 1, 128, 8>}, {transform_indices = @transform_12, window_bounds = array<i64: 1, 64, 8>}, {transform_indices = @transform_13, window_bounds = array<i64: 1, 128, 32>}, {transform_indices = @transform_14, window_bounds = array<i64: 1, 1, 32>}, {transform_indices = @transform_15, window_bounds = array<i64: 1, 1, 32>}, {transform_indices = @transform_16, window_bounds = array<i64: 1, 1, 32>}, {transform_indices = @transform_17, window_bounds = array<i64: 1, 32, 128>}, {transform_indices = @transform_18, window_bounds = array<i64: 1, 1, 128>}, {transform_indices = @transform_19, window_bounds = array<i64: 1, 128, 32>}, {transform_indices = @transform_20, window_bounds = array<i64: 1, 1, 32>}, {pipeline_mode = #tpu.pipeline_mode<synchronous>, transform_indices = @transform_21, window_bounds = array<i64: 16, 128>}]} {
    %c0_i32 = arith.constant 0 : i32
    %0 = arith.cmpi eq, %arg0, %c0_i32 : i32
    %1 = arith.extui %0 : i1 to i32
    %c0_i32_0 = arith.constant 0 : i32
    %2 = arith.cmpi ne, %1, %c0_i32_0 : i32
    scf.if %2 {
      %c0_73 = arith.constant 0 : index
      %c0_74 = arith.constant 0 : index
      %130 = vector.load %arg1[%c0_73, %c0_74] : memref<16x32xf32, #tpu.memory_space<vmem>>, vector<16x32xf32>
      %c0_75 = arith.constant 0 : index
      %c0_76 = arith.constant 0 : index
      %131 = vector.load %arg23[%c0_75, %c0_76] : memref<16x32xf32, #tpu.memory_space<vmem>>, vector<16x32xf32>
      tpu.vector_store %arg23[%c0_75, %c0_76], %130 {strides = array<i32>} : memref<16x32xf32, #tpu.memory_space<vmem>>, vector<16x32xf32>,
    } else {
    }
    %c0 = arith.constant 0 : index
    %c0_1 = arith.constant 0 : index
    %3 = vector.load %arg23[%c0, %c0_1] : memref<16x32xf32, #tpu.memory_space<vmem>>, vector<16x32xf32>
    %c0_2 = arith.constant 0 : index
    %c0_3 = arith.constant 0 : index
    %c0_4 = arith.constant 0 : index
    %4 = vector.load %arg8[%c0_2, %c0_3, %c0_4] : memref<1x1x32xf32, #tpu.memory_space<vmem>>, vector<1x1x32xf32>
    %5 = vector.shape_cast %4 : vector<1x1x32xf32> to vector<1x32xf32>
    %c0_5 = arith.constant 0 : index
    %c0_6 = arith.constant 0 : index
    %c0_7 = arith.constant 0 : index
    %6 = vector.load %arg9[%c0_5, %c0_6, %c0_7] : memref<1x1x32xf32, #tpu.memory_space<vmem>>, vector<1x1x32xf32>
    %7 = vector.shape_cast %6 : vector<1x1x32xf32> to vector<1x32xf32>
    %cst = arith.constant dense<0.000000e+00> : vector<16xf32>
    %8 = vector.multi_reduction <add>, %3, %cst [1] : vector<16x32xf32> to vector<16xf32>
    %9 = vector.shape_cast %8 : vector<16xf32> to vector<16x1xf32>
    %cst_8 = arith.constant 3.200000e+01 : f32
    %10 = vector.broadcast %cst_8 : f32 to vector<16x1xf32>
    %11 = arith.divf %9, %10 : vector<16x1xf32>
    %12 = vector.broadcast %11 : vector<16x1xf32> to vector<16x32xf32>
    %13 = arith.subf %3, %12 : vector<16x32xf32>
    %14 = arith.mulf %13, %13 : vector<16x32xf32>
    %cst_9 = arith.constant dense<0.000000e+00> : vector<16xf32>
    %15 = vector.multi_reduction <add>, %14, %cst_9 [1] : vector<16x32xf32> to vector<16xf32>
    %16 = vector.shape_cast %15 : vector<16xf32> to vector<16x1xf32>
    %cst_10 = arith.constant 3.200000e+01 : f32
    %17 = vector.broadcast %cst_10 : f32 to vector<16x1xf32>
    %18 = arith.divf %16, %17 : vector<16x1xf32>
    %cst_11 = arith.constant 9.99999974E-6 : f32
    %19 = vector.broadcast %cst_11 : f32 to vector<16x1xf32>
    %20 = arith.addf %18, %19 : vector<16x1xf32>
    %21 = math.rsqrt %20 : vector<16x1xf32>
    %22 = vector.broadcast %21 : vector<16x1xf32> to vector<16x32xf32>
    %23 = arith.mulf %13, %22 : vector<16x32xf32>
    %24 = vector.broadcast %5 : vector<1x32xf32> to vector<16x32xf32>
    %25 = arith.mulf %23, %24 : vector<16x32xf32>
    %26 = vector.broadcast %7 : vector<1x32xf32> to vector<16x32xf32>
    %27 = arith.addf %25, %26 : vector<16x32xf32>
    %28 = tpu.concatenate %27, %27, %27, %27 in 0 : vector<16x32xf32>, vector<16x32xf32>, vector<16x32xf32>, vector<16x32xf32> -> vector<64x32xf32>
    %29 = tpu.concatenate %28, %28, %28, %28 in 1 : vector<64x32xf32>, vector<64x32xf32>, vector<64x32xf32>, vector<64x32xf32> -> vector<64x128xf32>
    %c0_12 = arith.constant 0 : index
    %c0_13 = arith.constant 0 : index
    %30 = vector.load %arg2[%c0_12, %c0_13] : memref<64x128xf32, #tpu.memory_space<vmem>>, vector<64x128xf32>
    %31 = arith.mulf %29, %30 : vector<64x128xf32>
    %c0_14 = arith.constant 0 : index
    %c0_15 = arith.constant 0 : index
    %c0_16 = arith.constant 0 : index
    %32 = vector.load %arg10[%c0_14, %c0_15, %c0_16] : memref<1x128x8xf32, #tpu.memory_space<vmem>>, vector<1x128x8xf32>
    %33 = vector.shape_cast %32 : vector<1x128x8xf32> to vector<128x8xf32>
    %cst_17 = arith.constant dense<0.000000e+00> : vector<64x8xf32>
    %34 = tpu.matmul %31, %33, %cst_17 {dimension_numbers = #tpu.dot_dimension_numbers<[1], [0], [0], [1], [0, 0, 1, 1], [], []>} : vector<64x128xf32>, vector<128x8xf32>, vector<64x8xf32> -> vector<64x8xf32>
    %c0_18 = arith.constant 0 : index
    %c0_19 = arith.constant 0 : index
    %c0_20 = arith.constant 0 : index
    %35 = vector.load %arg11[%c0_18, %c0_19, %c0_20] : memref<1x64x8xf32, #tpu.memory_space<vmem>>, vector<1x64x8xf32>
    %36 = vector.shape_cast %35 : vector<1x64x8xf32> to vector<64x8xf32>
    %37 = arith.addf %34, %36 : vector<64x8xf32>
    %c0_21 = arith.constant 0 : index
    %c0_22 = arith.constant 0 : index
    %c0_23 = arith.constant 0 : index
    %38 = vector.load %arg12[%c0_21, %c0_22, %c0_23] : memref<1x128x8xf32, #tpu.memory_space<vmem>>, vector<1x128x8xf32>
    %39 = vector.shape_cast %38 : vector<1x128x8xf32> to vector<128x8xf32>
    %cst_24 = arith.constant dense<0.000000e+00> : vector<64x8xf32>
    %40 = tpu.matmul %31, %39, %cst_24 {dimension_numbers = #tpu.dot_dimension_numbers<[1], [0], [0], [1], [0, 0, 1, 1], [], []>} : vector<64x128xf32>, vector<128x8xf32>, vector<64x8xf32> -> vector<64x8xf32>
    %c0_25 = arith.constant 0 : index
    %c0_26 = arith.constant 0 : index
    %c0_27 = arith.constant 0 : index
    %41 = vector.load %arg13[%c0_25, %c0_26, %c0_27] : memref<1x64x8xf32, #tpu.memory_space<vmem>>, vector<1x64x8xf32>
    %42 = vector.shape_cast %41 : vector<1x64x8xf32> to vector<64x8xf32>
    %43 = arith.addf %40, %42 : vector<64x8xf32>
    %c0_28 = arith.constant 0 : index
    %c0_29 = arith.constant 0 : index
    %c0_30 = arith.constant 0 : index
    %44 = vector.load %arg14[%c0_28, %c0_29, %c0_30] : memref<1x128x32xf32, #tpu.memory_space<vmem>>, vector<1x128x32xf32>
    %45 = vector.shape_cast %44 : vector<1x128x32xf32> to vector<128x32xf32>
    %cst_31 = arith.constant dense<0.000000e+00> : vector<64x32xf32>
    %46 = tpu.matmul %31, %45, %cst_31 {dimension_numbers = #tpu.dot_dimension_numbers<[1], [0], [0], [1], [0, 0, 1, 1], [], []>} : vector<64x128xf32>, vector<128x32xf32>, vector<64x32xf32> -> vector<64x32xf32>
    %cst_32 = arith.constant dense<0.000000e+00> : vector<64x64xf32>
    %47 = tpu.matmul %37, %43, %cst_32 {dimension_numbers = #tpu.dot_dimension_numbers<[1], [1], [0], [0], [0, 0, 1, 0], [], []>} : vector<64x8xf32>, vector<64x8xf32>, vector<64x64xf32> -> vector<64x64xf32>
    %c0_33 = arith.constant 0 : index
    %c0_34 = arith.constant 0 : index
    %48 = vector.load %arg3[%c0_33, %c0_34] : memref<64x64xf32, #tpu.memory_space<vmem>>, vector<64x64xf32>
    %49 = arith.addf %47, %48 : vector<64x64xf32>
    %cst_35 = arith.constant dense<0xFF800000> : vector<64xf32>
    %50 = vector.multi_reduction <maximumf>, %49, %cst_35 [1] : vector<64x64xf32> to vector<64xf32>
    %51 = vector.shape_cast %50 : vector<64xf32> to vector<64x1xf32>
    %52 = vector.broadcast %51 : vector<64x1xf32> to vector<64x64xf32>
    %53 = arith.subf %49, %52 : vector<64x64xf32>
    %54 = math.exp %53 : vector<64x64xf32>
    %cst_36 = arith.constant dense<0.000000e+00> : vector<64xf32>
    %55 = vector.multi_reduction <add>, %54, %cst_36 [1] : vector<64x64xf32> to vector<64xf32>
    %56 = vector.shape_cast %55 : vector<64xf32> to vector<64x1xf32>
    %cst_37 = arith.constant dense<0.000000e+00> : vector<64x32xf32>
    %57 = tpu.matmul %54, %46, %cst_37 {dimension_numbers = #tpu.dot_dimension_numbers<[1], [0], [0], [1], [0, 0, 1, 1], [], []>} : vector<64x64xf32>, vector<64x32xf32>, vector<64x32xf32> -> vector<64x32xf32>
    %58 = tpu.reciprocal %56 {approx = true} : vector<64x1xf32> -> vector<64x1xf32>
    %59 = vector.broadcast %58 : vector<64x1xf32> to vector<64x32xf32>
    %60 = arith.mulf %57, %59 : vector<64x32xf32>
    %61 = vector.extract_strided_slice %60 {offsets = [0, 0], sizes = [16, 32], strides = [1, 1]} : vector<64x32xf32> to vector<16x32xf32>
    %62 = vector.extract_strided_slice %60 {offsets = [16, 0], sizes = [16, 32], strides = [1, 1]} : vector<64x32xf32> to vector<16x32xf32>
    %63 = arith.addf %61, %62 : vector<16x32xf32>
    %64 = vector.extract_strided_slice %60 {offsets = [32, 0], sizes = [16, 32], strides = [1, 1]} : vector<64x32xf32> to vector<16x32xf32>
    %65 = arith.addf %63, %64 : vector<16x32xf32>
    %66 = vector.extract_strided_slice %60 {offsets = [48, 0], sizes = [16, 32], strides = [1, 1]} : vector<64x32xf32> to vector<16x32xf32>
    %67 = arith.addf %65, %66 : vector<16x32xf32>
    %68 = arith.addf %3, %67 : vector<16x32xf32>
    %c0_38 = arith.constant 0 : index
    %c0_39 = arith.constant 0 : index
    %c0_40 = arith.constant 0 : index
    %69 = vector.load %arg15[%c0_38, %c0_39, %c0_40] : memref<1x1x32xf32, #tpu.memory_space<vmem>>, vector<1x1x32xf32>
    %70 = vector.shape_cast %69 : vector<1x1x32xf32> to vector<1x32xf32>
    %71 = vector.broadcast %70 : vector<1x32xf32> to vector<16x32xf32>
    %72 = arith.addf %68, %71 : vector<16x32xf32>
    %c0_41 = arith.constant 0 : index
    %c0_42 = arith.constant 0 : index
    %c0_43 = arith.constant 0 : index
    %73 = vector.load %arg16[%c0_41, %c0_42, %c0_43] : memref<1x1x32xf32, #tpu.memory_space<vmem>>, vector<1x1x32xf32>
    %74 = vector.shape_cast %73 : vector<1x1x32xf32> to vector<1x32xf32>
    %c0_44 = arith.constant 0 : index
    %c0_45 = arith.constant 0 : index
    %c0_46 = arith.constant 0 : index
    %75 = vector.load %arg17[%c0_44, %c0_45, %c0_46] : memref<1x1x32xf32, #tpu.memory_space<vmem>>, vector<1x1x32xf32>
    %76 = vector.shape_cast %75 : vector<1x1x32xf32> to vector<1x32xf32>
    %cst_47 = arith.constant dense<0.000000e+00> : vector<16xf32>
    %77 = vector.multi_reduction <add>, %72, %cst_47 [1] : vector<16x32xf32> to vector<16xf32>
    %78 = vector.shape_cast %77 : vector<16xf32> to vector<16x1xf32>
    %cst_48 = arith.constant 3.200000e+01 : f32
    %79 = vector.broadcast %cst_48 : f32 to vector<16x1xf32>
    %80 = arith.divf %78, %79 : vector<16x1xf32>
    %81 = vector.broadcast %80 : vector<16x1xf32> to vector<16x32xf32>
    %82 = arith.subf %72, %81 : vector<16x32xf32>
    %83 = arith.mulf %82, %82 : vector<16x32xf32>
    %cst_49 = arith.constant dense<0.000000e+00> : vector<16xf32>
    %84 = vector.multi_reduction <add>, %83, %cst_49 [1] : vector<16x32xf32> to vector<16xf32>
    %85 = vector.shape_cast %84 : vector<16xf32> to vector<16x1xf32>
    %cst_50 = arith.constant 3.200000e+01 : f32
    %86 = vector.broadcast %cst_50 : f32 to vector<16x1xf32>
    %87 = arith.divf %85, %86 : vector<16x1xf32>
    %cst_51 = arith.constant 9.99999974E-6 : f32
    %88 = vector.broadcast %cst_51 : f32 to vector<16x1xf32>
    %89 = arith.addf %87, %88 : vector<16x1xf32>
    %90 = math.rsqrt %89 : vector<16x1xf32>
    %91 = vector.broadcast %90 : vector<16x1xf32> to vector<16x32xf32>
    %92 = arith.mulf %82, %91 : vector<16x32xf32>
    %93 = vector.broadcast %74 : vector<1x32xf32> to vector<16x32xf32>
    %94 = arith.mulf %92, %93 : vector<16x32xf32>
    %95 = vector.broadcast %76 : vector<1x32xf32> to vector<16x32xf32>
    %96 = arith.addf %94, %95 : vector<16x32xf32>
    %c0_52 = arith.constant 0 : index
    %c0_53 = arith.constant 0 : index
    %c0_54 = arith.constant 0 : index
    %97 = vector.load %arg18[%c0_52, %c0_53, %c0_54] : memref<1x32x128xf32, #tpu.memory_space<vmem>>, vector<1x32x128xf32>
    %98 = vector.shape_cast %97 : vector<1x32x128xf32> to vector<32x128xf32>
    %cst_55 = arith.constant dense<0.000000e+00> : vector<16x128xf32>
    %99 = tpu.matmul %96, %98, %cst_55 {dimension_numbers = #tpu.dot_dimension_numbers<[1], [0], [0], [1], [0, 0, 1, 1], [], []>} : vector<16x32xf32>, vector<32x128xf32>, vector<16x128xf32> -> vector<16x128xf32>
    %c0_56 = arith.constant 0 : index
    %c0_57 = arith.constant 0 : index
    %c0_58 = arith.constant 0 : index
    %100 = vector.load %arg19[%c0_56, %c0_57, %c0_58] : memref<1x1x128xf32, #tpu.memory_space<vmem>>, vector<1x1x128xf32>
    %101 = vector.shape_cast %100 : vector<1x1x128xf32> to vector<1x128xf32>
    %102 = vector.broadcast %101 : vector<1x128xf32> to vector<16x128xf32>
    %103 = arith.addf %99, %102 : vector<16x128xf32>
    %cst_59 = arith.constant 0.636619746 : f32
    %104 = math.sqrt %cst_59 : f32
    %cst_60 = arith.constant 5.000000e-01 : f32
    %105 = vector.broadcast %cst_60 : f32 to vector<16x128xf32>
    %106 = arith.mulf %105, %103 : vector<16x128xf32>
    %cst_61 = arith.constant 4.471500e-02 : f32
    %107 = vector.broadcast %cst_61 : f32 to vector<16x128xf32>
    %108 = arith.mulf %107, %103 : vector<16x128xf32>
    %109 = arith.mulf %108, %103 : vector<16x128xf32>
    %110 = arith.mulf %109, %103 : vector<16x128xf32>
    %111 = arith.addf %103, %110 : vector<16x128xf32>
    %112 = vector.broadcast %104 : f32 to vector<16x128xf32>
    %113 = arith.mulf %112, %111 : vector<16x128xf32>
    %114 = math.tanh %113 : vector<16x128xf32>
    %cst_62 = arith.constant 1.000000e+00 : f32
    %115 = vector.broadcast %cst_62 : f32 to vector<16x128xf32>
    %116 = arith.addf %115, %114 : vector<16x128xf32>
    %117 = arith.mulf %106, %116 : vector<16x128xf32>
    %c0_63 = arith.constant 0 : index
    %c0_64 = arith.constant 0 : index
    %c0_65 = arith.constant 0 : index
    %118 = vector.load %arg20[%c0_63, %c0_64, %c0_65] : memref<1x128x32xf32, #tpu.memory_space<vmem>>, vector<1x128x32xf32>
    %119 = vector.shape_cast %118 : vector<1x128x32xf32> to vector<128x32xf32>
    %cst_66 = arith.constant dense<0.000000e+00> : vector<16x32xf32>
    %120 = tpu.matmul %117, %119, %cst_66 {dimension_numbers = #tpu.dot_dimension_numbers<[1], [0], [0], [1], [0, 0, 1, 1], [], []>} : vector<16x128xf32>, vector<128x32xf32>, vector<16x32xf32> -> vector<16x32xf32>
    %121 = arith.addf %72, %120 : vector<16x32xf32>
    %c0_67 = arith.constant 0 : index
    %c0_68 = arith.constant 0 : index
    %c0_69 = arith.constant 0 : index
    %122 = vector.load %arg21[%c0_67, %c0_68, %c0_69] : memref<1x1x32xf32, #tpu.memory_space<vmem>>, vector<1x1x32xf32>
    %123 = vector.shape_cast %122 : vector<1x1x32xf32> to vector<1x32xf32>
    %124 = vector.broadcast %123 : vector<1x32xf32> to vector<16x32xf32>
    %125 = arith.addf %121, %124 : vector<16x32xf32>
    %c0_70 = arith.constant 0 : index
    %c0_71 = arith.constant 0 : index
    %126 = vector.load %arg23[%c0_70, %c0_71] : memref<16x32xf32, #tpu.memory_space<vmem>>, vector<16x32xf32>
    tpu.vector_store %arg23[%c0_70, %c0_71], %125 {strides = array<i32>} : memref<16x32xf32, #tpu.memory_space<vmem>>, vector<16x32xf32>,
    %c1_i32 = arith.constant 1 : i32
    %127 = arith.cmpi eq, %arg0, %c1_i32 : i32
    %128 = arith.extui %127 : i1 to i32
    %c0_i32_72 = arith.constant 0 : i32
    %129 = arith.cmpi ne, %128, %c0_i32_72 : i32
    scf.if %129 {
      %c0_73 = arith.constant 0 : index
      %c0_74 = arith.constant 0 : index
      %130 = vector.load %arg4[%c0_73, %c0_74] : memref<1x32xf32, #tpu.memory_space<vmem>>, vector<1x32xf32>
      %c0_75 = arith.constant 0 : index
      %c0_76 = arith.constant 0 : index
      %131 = vector.load %arg5[%c0_75, %c0_76] : memref<1x32xf32, #tpu.memory_space<vmem>>, vector<1x32xf32>
      %cst_77 = arith.constant dense<0.000000e+00> : vector<16xf32>
      %132 = vector.multi_reduction <add>, %125, %cst_77 [1] : vector<16x32xf32> to vector<16xf32>
      %133 = vector.shape_cast %132 : vector<16xf32> to vector<16x1xf32>
      %cst_78 = arith.constant 3.200000e+01 : f32
      %134 = vector.broadcast %cst_78 : f32 to vector<16x1xf32>
      %135 = arith.divf %133, %134 : vector<16x1xf32>
      %136 = vector.broadcast %135 : vector<16x1xf32> to vector<16x32xf32>
      %137 = arith.subf %125, %136 : vector<16x32xf32>
      %138 = arith.mulf %137, %137 : vector<16x32xf32>
      %cst_79 = arith.constant dense<0.000000e+00> : vector<16xf32>
      %139 = vector.multi_reduction <add>, %138, %cst_79 [1] : vector<16x32xf32> to vector<16xf32>
      %140 = vector.shape_cast %139 : vector<16xf32> to vector<16x1xf32>
      %cst_80 = arith.constant 3.200000e+01 : f32
      %141 = vector.broadcast %cst_80 : f32 to vector<16x1xf32>
      %142 = arith.divf %140, %141 : vector<16x1xf32>
      %cst_81 = arith.constant 9.99999974E-6 : f32
      %143 = vector.broadcast %cst_81 : f32 to vector<16x1xf32>
      %144 = arith.addf %142, %143 : vector<16x1xf32>
      %145 = math.rsqrt %144 : vector<16x1xf32>
      %146 = vector.broadcast %145 : vector<16x1xf32> to vector<16x32xf32>
      %147 = arith.mulf %137, %146 : vector<16x32xf32>
      %148 = vector.broadcast %130 : vector<1x32xf32> to vector<16x32xf32>
      %149 = arith.mulf %147, %148 : vector<16x32xf32>
      %150 = vector.broadcast %131 : vector<1x32xf32> to vector<16x32xf32>
      %151 = arith.addf %149, %150 : vector<16x32xf32>
      %c0_82 = arith.constant 0 : index
      %c0_83 = arith.constant 0 : index
      %152 = vector.load %arg6[%c0_82, %c0_83] : memref<32x128xf32, #tpu.memory_space<vmem>>, vector<32x128xf32>
      %cst_84 = arith.constant dense<0.000000e+00> : vector<16x128xf32>
      %153 = tpu.matmul %151, %152, %cst_84 {dimension_numbers = #tpu.dot_dimension_numbers<[1], [0], [0], [1], [0, 0, 1, 1], [], []>} : vector<16x32xf32>, vector<32x128xf32>, vector<16x128xf32> -> vector<16x128xf32>
      %c0_85 = arith.constant 0 : index
      %c0_86 = arith.constant 0 : index
      %154 = vector.load %arg7[%c0_85, %c0_86] : memref<1x128xf32, #tpu.memory_space<vmem>>, vector<1x128xf32>
      %155 = vector.broadcast %154 : vector<1x128xf32> to vector<16x128xf32>
      %156 = arith.addf %153, %155 : vector<16x128xf32>
      %c0_87 = arith.constant 0 : index
      %c0_88 = arith.constant 0 : index
      %157 = vector.load %arg22[%c0_87, %c0_88] : memref<16x128xf32, #tpu.memory_space<vmem>>, vector<16x128xf32>
      tpu.vector_store %arg22[%c0_87, %c0_88], %156 {strides = array<i32>} : memref<16x128xf32, #tpu.memory_space<vmem>>, vector<16x128xf32>,
    } else {
    }
    return
  }
  func.func @transform_0(%arg0: i32) -> (i32, i32) {
    %c0_i32 = arith.constant 0 : i32
    %c0_i32_0 = arith.constant 0 : i32
    %c0_i32_1 = arith.constant 0 : i32
    return %c0_i32, %c0_i32_0 : i32, i32
  }
  func.func @transform_1(%arg0: i32) -> (i32, i32) {
    %c0_i32 = arith.constant 0 : i32
    %c0_i32_0 = arith.constant 0 : i32
    %c0_i32_1 = arith.constant 0 : i32
    return %c0_i32, %c0_i32_0 : i32, i32
  }
  func.func @transform_2(%arg0: i32) -> (i32, i32) {
    %c0_i32 = arith.constant 0 : i32
    %c0_i32_0 = arith.constant 0 : i32
    %c0_i32_1 = arith.constant 0 : i32
    return %c0_i32, %c0_i32_0 : i32, i32
  }
  func.func @transform_3(%arg0: i32) -> (i32, i32) {
    %c0_i32 = arith.constant 0 : i32
    %c0_i32_0 = arith.constant 0 : i32
    %c0_i32_1 = arith.constant 0 : i32
    return %c0_i32, %c0_i32_0 : i32, i32
  }
  func.func @transform_4(%arg0: i32) -> (i32, i32) {
    %c0_i32 = arith.constant 0 : i32
    %c0_i32_0 = arith.constant 0 : i32
    %c0_i32_1 = arith.constant 0 : i32
    return %c0_i32, %c0_i32_0 : i32, i32
  }
  func.func @transform_5(%arg0: i32) -> (i32, i32) {
    %c0_i32 = arith.constant 0 : i32
    %c0_i32_0 = arith.constant 0 : i32
    %c0_i32_1 = arith.constant 0 : i32
    return %c0_i32, %c0_i32_0 : i32, i32
  }
  func.func @transform_6(%arg0: i32) -> (i32, i32) {
    %c0_i32 = arith.constant 0 : i32
    %c0_i32_0 = arith.constant 0 : i32
    %c0_i32_1 = arith.constant 0 : i32
    return %c0_i32, %c0_i32_0 : i32, i32
  }
  func.func @transform_7(%arg0: i32) -> (i32, i32, i32) {
    %c0_i32 = arith.constant 0 : i32
    %c0_i32_0 = arith.constant 0 : i32
    %c0_i32_1 = arith.constant 0 : i32
    return %arg0, %c0_i32, %c0_i32_0 : i32, i32, i32
  }
  func.func @transform_8(%arg0: i32) -> (i32, i32, i32) {
    %c0_i32 = arith.constant 0 : i32
    %c0_i32_0 = arith.constant 0 : i32
    %c0_i32_1 = arith.constant 0 : i32
    return %arg0, %c0_i32, %c0_i32_0 : i32, i32, i32
  }
  func.func @transform_9(%arg0: i32) -> (i32, i32, i32) {
    %c0_i32 = arith.constant 0 : i32
    %c0_i32_0 = arith.constant 0 : i32
    %c0_i32_1 = arith.constant 0 : i32
    return %arg0, %c0_i32, %c0_i32_0 : i32, i32, i32
  }
  func.func @transform_10(%arg0: i32) -> (i32, i32, i32) {
    %c0_i32 = arith.constant 0 : i32
    %c0_i32_0 = arith.constant 0 : i32
    %c0_i32_1 = arith.constant 0 : i32
    return %arg0, %c0_i32, %c0_i32_0 : i32, i32, i32
  }
  func.func @transform_11(%arg0: i32) -> (i32, i32, i32) {
    %c0_i32 = arith.constant 0 : i32
    %c0_i32_0 = arith.constant 0 : i32
    %c0_i32_1 = arith.constant 0 : i32
    return %arg0, %c0_i32, %c0_i32_0 : i32, i32, i32
  }
  func.func @transform_12(%arg0: i32) -> (i32, i32, i32) {
    %c0_i32 = arith.constant 0 : i32
    %c0_i32_0 = arith.constant 0 : i32
    %c0_i32_1 = arith.constant 0 : i32
    return %arg0, %c0_i32, %c0_i32_0 : i32, i32, i32
  }
  func.func @transform_13(%arg0: i32) -> (i32, i32, i32) {
    %c0_i32 = arith.constant 0 : i32
    %c0_i32_0 = arith.constant 0 : i32
    %c0_i32_1 = arith.constant 0 : i32
    return %arg0, %c0_i32, %c0_i32_0 : i32, i32, i32
  }
  func.func @transform_14(%arg0: i32) -> (i32, i32, i32) {
    %c0_i32 = arith.constant 0 : i32
    %c0_i32_0 = arith.constant 0 : i32
    %c0_i32_1 = arith.constant 0 : i32
    return %arg0, %c0_i32, %c0_i32_0 : i32, i32, i32
  }
  func.func @transform_15(%arg0: i32) -> (i32, i32, i32) {
    %c0_i32 = arith.constant 0 : i32
    %c0_i32_0 = arith.constant 0 : i32
    %c0_i32_1 = arith.constant 0 : i32
    return %arg0, %c0_i32, %c0_i32_0 : i32, i32, i32
  }
  func.func @transform_16(%arg0: i32) -> (i32, i32, i32) {
    %c0_i32 = arith.constant 0 : i32
    %c0_i32_0 = arith.constant 0 : i32
    %c0_i32_1 = arith.constant 0 : i32
    return %arg0, %c0_i32, %c0_i32_0 : i32, i32, i32
  }
  func.func @transform_17(%arg0: i32) -> (i32, i32, i32) {
    %c0_i32 = arith.constant 0 : i32
    %c0_i32_0 = arith.constant 0 : i32
    %c0_i32_1 = arith.constant 0 : i32
    return %arg0, %c0_i32, %c0_i32_0 : i32, i32, i32
  }
  func.func @transform_18(%arg0: i32) -> (i32, i32, i32) {
    %c0_i32 = arith.constant 0 : i32
    %c0_i32_0 = arith.constant 0 : i32
    %c0_i32_1 = arith.constant 0 : i32
    return %arg0, %c0_i32, %c0_i32_0 : i32, i32, i32
  }
  func.func @transform_19(%arg0: i32) -> (i32, i32, i32) {
    %c0_i32 = arith.constant 0 : i32
    %c0_i32_0 = arith.constant 0 : i32
    %c0_i32_1 = arith.constant 0 : i32
    return %arg0, %c0_i32, %c0_i32_0 : i32, i32, i32
  }
  func.func @transform_20(%arg0: i32) -> (i32, i32, i32) {
    %c0_i32 = arith.constant 0 : i32
    %c0_i32_0 = arith.constant 0 : i32
    %c0_i32_1 = arith.constant 0 : i32
    return %arg0, %c0_i32, %c0_i32_0 : i32, i32, i32
  }
  func.func @transform_21(%arg0: i32) -> (i32, i32) {
    %c0_i32 = arith.constant 0 : i32
    %c0_i32_0 = arith.constant 0 : i32
    %c0_i32_1 = arith.constant 0 : i32
    return %c0_i32, %c0_i32_0 : i32, i32
  }
}

</mosaic_0001>

<llo_original>
// kernel: tpu_custom_call.1
$region0: #{tpu_custom_call.1}
  #allocation0 [shape = 'u32[]', space=smem, size = 0x4, offset = 0x4, fixed_abs, tag = 'smem constant byte address 0x4 - core index']
  #allocation1 [shape = 'u32[144,128]{1,0:T(1,128)}', space=vmem, size = 0x12000, scoped, tag = 'internal scratch']
  #allocation2 [shape = 'f32[16,32]{1,0:T(8,128)}', space=vmem, size = 0x2000, scoped, tag = 'scratch operand']
  %s0 = inlined_call_operand.vmem [shape: f32[16,32], index: 0, kind: input, shape index: {}]
  %s1 = inlined_call_operand.vmem [shape: f32[64,128], index: 1, kind: input, shape index: {}]
  %s2 = inlined_call_operand.vmem [shape: f32[64,64], index: 2, kind: input, shape index: {}]
  %s3 = inlined_call_operand.vmem [shape: f32[1,32], index: 3, kind: input, shape index: {}]
  %s4 = inlined_call_operand.vmem [shape: f32[1,32], index: 4, kind: input, shape index: {}]
  %s5 = inlined_call_operand.vmem [shape: f32[32,128], index: 5, kind: input, shape index: {}]
  %s6 = inlined_call_operand.vmem [shape: f32[1,128], index: 6, kind: input, shape index: {}]
  %s7 = inlined_call_operand.vmem [shape: f32[2,1,32], index: 7, kind: input, shape index: {}]
  %s8 = inlined_call_operand.vmem [shape: f32[2,1,32], index: 8, kind: input, shape index: {}]
  %s9 = inlined_call_operand.vmem [shape: f32[2,128,8], index: 9, kind: input, shape index: {}]
  %s10 = inlined_call_operand.vmem [shape: f32[2,64,8], index: 10, kind: input, shape index: {}]
  %s11 = inlined_call_operand.vmem [shape: f32[2,128,8], index: 11, kind: input, shape index: {}]
  %s12 = inlined_call_operand.vmem [shape: f32[2,64,8], index: 12, kind: input, shape index: {}]
  %s13 = inlined_call_operand.vmem [shape: f32[2,128,32], index: 13, kind: input, shape index: {}]
  %s14 = inlined_call_operand.vmem [shape: f32[2,1,32], index: 14, kind: input, shape index: {}]
  %s15 = inlined_call_operand.vmem [shape: f32[2,1,32], index: 15, kind: input, shape index: {}]
  %s16 = inlined_call_operand.vmem [shape: f32[2,1,32], index: 16, kind: input, shape index: {}]
  %s17 = inlined_call_operand.vmem [shape: f32[2,32,128], index: 17, kind: input, shape index: {}]
  %s18 = inlined_call_operand.vmem [shape: f32[2,1,128], index: 18, kind: input, shape index: {}]
  %s19 = inlined_call_operand.vmem [shape: f32[2,128,32], index: 19, kind: input, shape index: {}]
  %s20 = inlined_call_operand.vmem [shape: f32[2,1,32], index: 20, kind: input, shape index: {}]
  %s21 = inlined_call_operand.hbm [shape: f32[16,128], index: 21, kind: output, shape index: {}]
  %s22 = sld [smem:[#allocation0]]
  $region125: #{tpu_custom_call.1} parent=0
    _
  %s24 = ssub.s32 1, %s22
  %s25 = scalar_select 0, %s24, %s22
  $region1: #{tpu_custom_call.1} parent=0
    #allocation3 [shape = 'u8[8192]{0}', space=vmem, size = 0x2000, scoped, tag = 'output window, operand 0, single buffered']
    #allocation4 [shape = 's32[2]{0}', space=sflag, size = 0x8, scoped, tag = 'scoped memory for tpu_custom_call.1']
    %26 = vsyncpa [#allocation4], 0
    loop: start=0, step=1, limit=4
    $region2: #{tpu_custom_call.1} parent=1 // loop_pre_header
      _
    $region3: #{tpu_custom_call.1} parent=1 // loop_header
      %s28 = sphi 0, %s32
      %p29 = scmp.ge.s32.totalorder %s28, 4
      %s36 = sphi 0, %s36
      %s38 = sphi 0, %s36
      %s39 = sphi 0, %s38
      %s53 = sphi 0, %s39
      %s57 = sphi 0, %s57
      %s59 = sphi 0, %s57
      %s60 = sphi 0, %s59
      %s74 = sphi 0, %s60
      %s78 = sphi 0, %s78
      %s80 = sphi 0, %s78
      %s81 = sphi 0, %s80
      %s95 = sphi 0, %s81
      %s99 = sphi 0, %s99
      %s101 = sphi 0, %s99
      %s102 = sphi 0, %s101
      %s116 = sphi 0, %s102
      %s120 = sphi 0, %s120
      %s122 = sphi 0, %s120
      %s123 = sphi 0, %s122
      %s137 = sphi 0, %s123
      %s141 = sphi 0, %s141
      %s143 = sphi 0, %s141
      %s144 = sphi 0, %s143
      %s158 = sphi 0, %s144
      %s162 = sphi 0, %s162
      %s164 = sphi 0, %s162
      %s165 = sphi 0, %s164
      %s179 = sphi 0, %s165
      %s185 = sphi 0, %s187
      %s188 = sphi 0, %s185
      %s189 = sphi 0, %s188
      %s205 = sphi 0, %s189
      %s211 = sphi 0, %s213
      %s214 = sphi 0, %s211
      %s215 = sphi 0, %s214
      %s231 = sphi 0, %s215
      %s237 = sphi 0, %s239
      %s240 = sphi 0, %s237
      %s241 = sphi 0, %s240
      %s257 = sphi 0, %s241
      %s263 = sphi 0, %s265
      %s266 = sphi 0, %s263
      %s267 = sphi 0, %s266
      %s283 = sphi 0, %s267
      %s289 = sphi 0, %s291
      %s292 = sphi 0, %s289
      %s293 = sphi 0, %s292
      %s309 = sphi 0, %s293
      %s315 = sphi 0, %s317
      %s318 = sphi 0, %s315
      %s319 = sphi 0, %s318
      %s335 = sphi 0, %s319
      %s341 = sphi 0, %s343
      %s344 = sphi 0, %s341
      %s345 = sphi 0, %s344
      %s361 = sphi 0, %s345
      %s367 = sphi 0, %s369
      %s370 = sphi 0, %s367
      %s371 = sphi 0, %s370
      %s387 = sphi 0, %s371
      %s393 = sphi 0, %s395
      %s396 = sphi 0, %s393
      %s397 = sphi 0, %s396
      %s413 = sphi 0, %s397
      %s419 = sphi 0, %s421
      %s422 = sphi 0, %s419
      %s423 = sphi 0, %s422
      %s439 = sphi 0, %s423
      %s445 = sphi 0, %s447
      %s448 = sphi 0, %s445
      %s449 = sphi 0, %s448
      %s465 = sphi 0, %s449
      %s471 = sphi 0, %s473
      %s474 = sphi 0, %s471
      %s475 = sphi 0, %s474
      %s491 = sphi 0, %s475
      %s497 = sphi 0, %s499
      %s500 = sphi 0, %s497
      %s501 = sphi 0, %s500
      %s517 = sphi 0, %s501
      %s523 = sphi 0, %s525
      %s526 = sphi 0, %s523
      %s527 = sphi 0, %s526
      %s543 = sphi 0, %s527
      %s547 = sphi 0, %s547
      %s549 = sphi 0, %s547
      %s550 = sphi 0, %s549
      %s564 = sphi 0, %s550
    $region4: #{tpu_custom_call.1} parent=1 // loop_header_branch
      %31 = sbr.rel (%p29) target = $region8
    $region5: #{tpu_custom_call.1} parent=1 // loop_body
      %s33 = ssub.s32 %s28, 1
      %s34 = ssub.s32 %s28, 2
      %s35 = sadd.s32 %s28, 1
      %s37 = sadd.s32 %s36, 1
      %p40 = scmp.eq.s32.totalorder %s28, 1
      %p41 = scmp.ne.s32.totalorder %s36, %s38
      %p42 = scmp.eq.s32.totalorder %s28, 0
      %p43 = por %p41, %p42
      %p44 = scmp.ne.s32.totalorder %s36, %s38
      %p45 = scmp.eq.s32.totalorder %s33, 1
      %p46 = por %p44, %p45
      %p47 = scmp.ne.s32.totalorder %s38, %s39
      %p48 = scmp.eq.s32.totalorder %s33, 0
      %p49 = por %p47, %p48
      %p50 = scmp.ne.s32.totalorder %s38, %s39
      %p51 = scmp.eq.s32.totalorder %s34, 1
      %p52 = por %p50, %p51
      %p54 = scmp.ne.s32.totalorder %s39, %s53
      %p55 = scmp.eq.s32.totalorder %s34, 0
      %p56 = por %p54, %p55
      %s58 = sadd.s32 %s57, 1
      %p61 = scmp.eq.s32.totalorder %s28, 1
      %p62 = scmp.ne.s32.totalorder %s57, %s59
      %p63 = scmp.eq.s32.totalorder %s28, 0
      %p64 = por %p62, %p63
      %p65 = scmp.ne.s32.totalorder %s57, %s59
      %p66 = scmp.eq.s32.totalorder %s33, 1
      %p67 = por %p65, %p66
      %p68 = scmp.ne.s32.totalorder %s59, %s60
      %p69 = scmp.eq.s32.totalorder %s33, 0
      %p70 = por %p68, %p69
      %p71 = scmp.ne.s32.totalorder %s59, %s60
      %p72 = scmp.eq.s32.totalorder %s34, 1
      %p73 = por %p71, %p72
      %p75 = scmp.ne.s32.totalorder %s60, %s74
      %p76 = scmp.eq.s32.totalorder %s34, 0
      %p77 = por %p75, %p76
      %s79 = sadd.s32 %s78, 1
      %p82 = scmp.eq.s32.totalorder %s28, 1
      %p83 = scmp.ne.s32.totalorder %s78, %s80
      %p84 = scmp.eq.s32.totalorder %s28, 0
      %p85 = por %p83, %p84
      %p86 = scmp.ne.s32.totalorder %s78, %s80
      %p87 = scmp.eq.s32.totalorder %s33, 1
      %p88 = por %p86, %p87
      %p89 = scmp.ne.s32.totalorder %s80, %s81
      %p90 = scmp.eq.s32.totalorder %s33, 0
      %p91 = por %p89, %p90
      %p92 = scmp.ne.s32.totalorder %s80, %s81
      %p93 = scmp.eq.s32.totalorder %s34, 1
      %p94 = por %p92, %p93
      %p96 = scmp.ne.s32.totalorder %s81, %s95
      %p97 = scmp.eq.s32.totalorder %s34, 0
      %p98 = por %p96, %p97
      %s100 = sadd.s32 %s99, 1
      %p103 = scmp.eq.s32.totalorder %s28, 1
      %p104 = scmp.ne.s32.totalorder %s99, %s101
      %p105 = scmp.eq.s32.totalorder %s28, 0
      %p106 = por %p104, %p105
      %p107 = scmp.ne.s32.totalorder %s99, %s101
      %p108 = scmp.eq.s32.totalorder %s33, 1
      %p109 = por %p107, %p108
      %p110 = scmp.ne.s32.totalorder %s101, %s102
      %p111 = scmp.eq.s32.totalorder %s33, 0
      %p112 = por %p110, %p111
      %p113 = scmp.ne.s32.totalorder %s101, %s102
      %p114 = scmp.eq.s32.totalorder %s34, 1
      %p115 = por %p113, %p114
      %p117 = scmp.ne.s32.totalorder %s102, %s116
      %p118 = scmp.eq.s32.totalorder %s34, 0
      %p119 = por %p117, %p118
      %s121 = sadd.s32 %s120, 1
      %p124 = scmp.eq.s32.totalorder %s28, 1
      %p125 = scmp.ne.s32.totalorder %s120, %s122
      %p126 = scmp.eq.s32.totalorder %s28, 0
      %p127 = por %p125, %p126
      %p128 = scmp.ne.s32.totalorder %s120, %s122
      %p129 = scmp.eq.s32.totalorder %s33, 1
      %p130 = por %p128, %p129
      %p131 = scmp.ne.s32.totalorder %s122, %s123
      %p132 = scmp.eq.s32.totalorder %s33, 0
      %p133 = por %p131, %p132
      %p134 = scmp.ne.s32.totalorder %s122, %s123
      %p135 = scmp.eq.s32.totalorder %s34, 1
      %p136 = por %p134, %p135
      %p138 = scmp.ne.s32.totalorder %s123, %s137
      %p139 = scmp.eq.s32.totalorder %s34, 0
      %p140 = por %p138, %p139
      %s142 = sadd.s32 %s141, 1
      %p145 = scmp.eq.s32.totalorder %s28, 1
      %p146 = scmp.ne.s32.totalorder %s141, %s143
      %p147 = scmp.eq.s32.totalorder %s28, 0
      %p148 = por %p146, %p147
      %p149 = scmp.ne.s32.totalorder %s141, %s143
      %p150 = scmp.eq.s32.totalorder %s33, 1
      %p151 = por %p149, %p150
      %p152 = scmp.ne.s32.totalorder %s143, %s144
      %p153 = scmp.eq.s32.totalorder %s33, 0
      %p154 = por %p152, %p153
      %p155 = scmp.ne.s32.totalorder %s143, %s144
      %p156 = scmp.eq.s32.totalorder %s34, 1
      %p157 = por %p155, %p156
      %p159 = scmp.ne.s32.totalorder %s144, %s158
      %p160 = scmp.eq.s32.totalorder %s34, 0
      %p161 = por %p159, %p160
      %s163 = sadd.s32 %s162, 1
      %p166 = scmp.eq.s32.totalorder %s28, 1
      %p167 = scmp.ne.s32.totalorder %s162, %s164
      %p168 = scmp.eq.s32.totalorder %s28, 0
      %p169 = por %p167, %p168
      %p170 = scmp.ne.s32.totalorder %s162, %s164
      %p171 = scmp.eq.s32.totalorder %s33, 1
      %p172 = por %p170, %p171
      %p173 = scmp.ne.s32.totalorder %s164, %s165
      %p174 = scmp.eq.s32.totalorder %s33, 0
      %p175 = por %p173, %p174
      %p176 = scmp.ne.s32.totalorder %s164, %s165
      %p177 = scmp.eq.s32.totalorder %s34, 1
      %p178 = por %p176, %p177
      %p180 = scmp.ne.s32.totalorder %s165, %s179
      %p181 = scmp.eq.s32.totalorder %s34, 0
      %p182 = por %p180, %p181
      %s183 = ssub.s32 %s28, %s35
      %p184 = scmp.eq.s32.totalorder %s183, 0
      %s186 = sadd.s32 %s185, 1
      %s187 = scalar_select %p184, %s185, %s186
      %p190 = pneg %p184
      %p191 = scmp.eq.s32.totalorder %s28, 1
      %p192 = por %p190, %p191
      %p193 = scmp.ne.s32.totalorder %s185, %s188
      %p194 = scmp.eq.s32.totalorder %s28, 0
      %p195 = por %p193, %p194
      %p196 = scmp.ne.s32.totalorder %s185, %s188
      %p197 = scmp.eq.s32.totalorder %s33, 1
      %p198 = por %p196, %p197
      %p199 = scmp.ne.s32.totalorder %s188, %s189
      %p200 = scmp.eq.s32.totalorder %s33, 0
      %p201 = por %p199, %p200
      %p202 = scmp.ne.s32.totalorder %s188, %s189
      %p203 = scmp.eq.s32.totalorder %s34, 1
      %p204 = por %p202, %p203
      %p206 = scmp.ne.s32.totalorder %s189, %s205
      %p207 = scmp.eq.s32.totalorder %s34, 0
      %p208 = por %p206, %p207
      %s209 = ssub.s32 %s28, %s35
      %p210 = scmp.eq.s32.totalorder %s209, 0
      %s212 = sadd.s32 %s211, 1
      %s213 = scalar_select %p210, %s211, %s212
      %p216 = pneg %p210
      %p217 = scmp.eq.s32.totalorder %s28, 1
      %p218 = por %p216, %p217
      %p219 = scmp.ne.s32.totalorder %s211, %s214
      %p220 = scmp.eq.s32.totalorder %s28, 0
      %p221 = por %p219, %p220
      %p222 = scmp.ne.s32.totalorder %s211, %s214
      %p223 = scmp.eq.s32.totalorder %s33, 1
      %p224 = por %p222, %p223
      %p225 = scmp.ne.s32.totalorder %s214, %s215
      %p226 = scmp.eq.s32.totalorder %s33, 0
      %p227 = por %p225, %p226
      %p228 = scmp.ne.s32.totalorder %s214, %s215
      %p229 = scmp.eq.s32.totalorder %s34, 1
      %p230 = por %p228, %p229
      %p232 = scmp.ne.s32.totalorder %s215, %s231
      %p233 = scmp.eq.s32.totalorder %s34, 0
      %p234 = por %p232, %p233
      %s235 = ssub.s32 %s28, %s35
      %p236 = scmp.eq.s32.totalorder %s235, 0
      %s238 = sadd.s32 %s237, 1
      %s239 = scalar_select %p236, %s237, %s238
      %p242 = pneg %p236
      %p243 = scmp.eq.s32.totalorder %s28, 1
      %p244 = por %p242, %p243
      %p245 = scmp.ne.s32.totalorder %s237, %s240
      %p246 = scmp.eq.s32.totalorder %s28, 0
      %p247 = por %p245, %p246
      %p248 = scmp.ne.s32.totalorder %s237, %s240
      %p249 = scmp.eq.s32.totalorder %s33, 1
      %p250 = por %p248, %p249
      %p251 = scmp.ne.s32.totalorder %s240, %s241
      %p252 = scmp.eq.s32.totalorder %s33, 0
      %p253 = por %p251, %p252
      %p254 = scmp.ne.s32.totalorder %s240, %s241
      %p255 = scmp.eq.s32.totalorder %s34, 1
      %p256 = por %p254, %p255
      %p258 = scmp.ne.s32.totalorder %s241, %s257
      %p259 = scmp.eq.s32.totalorder %s34, 0
      %p260 = por %p258, %p259
      %s261 = ssub.s32 %s28, %s35
      %p262 = scmp.eq.s32.totalorder %s261, 0
      %s264 = sadd.s32 %s263, 1
      %s265 = scalar_select %p262, %s263, %s264
      %p268 = pneg %p262
      %p269 = scmp.eq.s32.totalorder %s28, 1
      %p270 = por %p268, %p269
      %p271 = scmp.ne.s32.totalorder %s263, %s266
      %p272 = scmp.eq.s32.totalorder %s28, 0
      %p273 = por %p271, %p272
      %p274 = scmp.ne.s32.totalorder %s263, %s266
      %p275 = scmp.eq.s32.totalorder %s33, 1
      %p276 = por %p274, %p275
      %p277 = scmp.ne.s32.totalorder %s266, %s267
      %p278 = scmp.eq.s32.totalorder %s33, 0
      %p279 = por %p277, %p278
      %p280 = scmp.ne.s32.totalorder %s266, %s267
      %p281 = scmp.eq.s32.totalorder %s34, 1
      %p282 = por %p280, %p281
      %p284 = scmp.ne.s32.totalorder %s267, %s283
      %p285 = scmp.eq.s32.totalorder %s34, 0
      %p286 = por %p284, %p285
      %s287 = ssub.s32 %s28, %s35
      %p288 = scmp.eq.s32.totalorder %s287, 0
      %s290 = sadd.s32 %s289, 1
      %s291 = scalar_select %p288, %s289, %s290
      %p294 = pneg %p288
      %p295 = scmp.eq.s32.totalorder %s28, 1
      %p296 = por %p294, %p295
      %p297 = scmp.ne.s32.totalorder %s289, %s292
      %p298 = scmp.eq.s32.totalorder %s28, 0
      %p299 = por %p297, %p298
      %p300 = scmp.ne.s32.totalorder %s289, %s292
      %p301 = scmp.eq.s32.totalorder %s33, 1
      %p302 = por %p300, %p301
      %p303 = scmp.ne.s32.totalorder %s292, %s293
      %p304 = scmp.eq.s32.totalorder %s33, 0
      %p305 = por %p303, %p304
      %p306 = scmp.ne.s32.totalorder %s292, %s293
      %p307 = scmp.eq.s32.totalorder %s34, 1
      %p308 = por %p306, %p307
      %p310 = scmp.ne.s32.totalorder %s293, %s309
      %p311 = scmp.eq.s32.totalorder %s34, 0
      %p312 = por %p310, %p311
      %s313 = ssub.s32 %s28, %s35
      %p314 = scmp.eq.s32.totalorder %s313, 0
      %s316 = sadd.s32 %s315, 1
      %s317 = scalar_select %p314, %s315, %s316
      %p320 = pneg %p314
      %p321 = scmp.eq.s32.totalorder %s28, 1
      %p322 = por %p320, %p321
      %p323 = scmp.ne.s32.totalorder %s315, %s318
      %p324 = scmp.eq.s32.totalorder %s28, 0
      %p325 = por %p323, %p324
      %p326 = scmp.ne.s32.totalorder %s315, %s318
      %p327 = scmp.eq.s32.totalorder %s33, 1
      %p328 = por %p326, %p327
      %p329 = scmp.ne.s32.totalorder %s318, %s319
      %p330 = scmp.eq.s32.totalorder %s33, 0
      %p331 = por %p329, %p330
      %p332 = scmp.ne.s32.totalorder %s318, %s319
      %p333 = scmp.eq.s32.totalorder %s34, 1
      %p334 = por %p332, %p333
      %p336 = scmp.ne.s32.totalorder %s319, %s335
      %p337 = scmp.eq.s32.totalorder %s34, 0
      %p338 = por %p336, %p337
      %s339 = ssub.s32 %s28, %s35
      %p340 = scmp.eq.s32.totalorder %s339, 0
      %s342 = sadd.s32 %s341, 1
      %s343 = scalar_select %p340, %s341, %s342
      %p346 = pneg %p340
      %p347 = scmp.eq.s32.totalorder %s28, 1
      %p348 = por %p346, %p347
      %p349 = scmp.ne.s32.totalorder %s341, %s344
      %p350 = scmp.eq.s32.totalorder %s28, 0
      %p351 = por %p349, %p350
      %p352 = scmp.ne.s32.totalorder %s341, %s344
      %p353 = scmp.eq.s32.totalorder %s33, 1
      %p354 = por %p352, %p353
      %p355 = scmp.ne.s32.totalorder %s344, %s345
      %p356 = scmp.eq.s32.totalorder %s33, 0
      %p357 = por %p355, %p356
      %p358 = scmp.ne.s32.totalorder %s344, %s345
      %p359 = scmp.eq.s32.totalorder %s34, 1
      %p360 = por %p358, %p359
      %p362 = scmp.ne.s32.totalorder %s345, %s361
      %p363 = scmp.eq.s32.totalorder %s34, 0
      %p364 = por %p362, %p363
      %s365 = ssub.s32 %s28, %s35
      %p366 = scmp.eq.s32.totalorder %s365, 0
      %s368 = sadd.s32 %s367, 1
      %s369 = scalar_select %p366, %s367, %s368
      %p372 = pneg %p366
      %p373 = scmp.eq.s32.totalorder %s28, 1
      %p374 = por %p372, %p373
      %p375 = scmp.ne.s32.totalorder %s367, %s370
      %p376 = scmp.eq.s32.totalorder %s28, 0
      %p377 = por %p375, %p376
      %p378 = scmp.ne.s32.totalorder %s367, %s370
      %p379 = scmp.eq.s32.totalorder %s33, 1
      %p380 = por %p378, %p379
      %p381 = scmp.ne.s32.totalorder %s370, %s371
      %p382 = scmp.eq.s32.totalorder %s33, 0
      %p383 = por %p381, %p382
      %p384 = scmp.ne.s32.totalorder %s370, %s371
      %p385 = scmp.eq.s32.totalorder %s34, 1
      %p386 = por %p384, %p385
      %p388 = scmp.ne.s32.totalorder %s371, %s387
      %p389 = scmp.eq.s32.totalorder %s34, 0
      %p390 = por %p388, %p389
      %s391 = ssub.s32 %s28, %s35
      %p392 = scmp.eq.s32.totalorder %s391, 0
      %s394 = sadd.s32 %s393, 1
      %s395 = scalar_select %p392, %s393, %s394
      %p398 = pneg %p392
      %p399 = scmp.eq.s32.totalorder %s28, 1
      %p400 = por %p398, %p399
      %p401 = scmp.ne.s32.totalorder %s393, %s396
      %p402 = scmp.eq.s32.totalorder %s28, 0
      %p403 = por %p401, %p402
      %p404 = scmp.ne.s32.totalorder %s393, %s396
      %p405 = scmp.eq.s32.totalorder %s33, 1
      %p406 = por %p404, %p405
      %p407 = scmp.ne.s32.totalorder %s396, %s397
      %p408 = scmp.eq.s32.totalorder %s33, 0
      %p409 = por %p407, %p408
      %p410 = scmp.ne.s32.totalorder %s396, %s397
      %p411 = scmp.eq.s32.totalorder %s34, 1
      %p412 = por %p410, %p411
      %p414 = scmp.ne.s32.totalorder %s397, %s413
      %p415 = scmp.eq.s32.totalorder %s34, 0
      %p416 = por %p414, %p415
      %s417 = ssub.s32 %s28, %s35
      %p418 = scmp.eq.s32.totalorder %s417, 0
      %s420 = sadd.s32 %s419, 1
      %s421 = scalar_select %p418, %s419, %s420
      %p424 = pneg %p418
      %p425 = scmp.eq.s32.totalorder %s28, 1
      %p426 = por %p424, %p425
      %p427 = scmp.ne.s32.totalorder %s419, %s422
      %p428 = scmp.eq.s32.totalorder %s28, 0
      %p429 = por %p427, %p428
      %p430 = scmp.ne.s32.totalorder %s419, %s422
      %p431 = scmp.eq.s32.totalorder %s33, 1
      %p432 = por %p430, %p431
      %p433 = scmp.ne.s32.totalorder %s422, %s423
      %p434 = scmp.eq.s32.totalorder %s33, 0
      %p435 = por %p433, %p434
      %p436 = scmp.ne.s32.totalorder %s422, %s423
      %p437 = scmp.eq.s32.totalorder %s34, 1
      %p438 = por %p436, %p437
      %p440 = scmp.ne.s32.totalorder %s423, %s439
      %p441 = scmp.eq.s32.totalorder %s34, 0
      %p442 = por %p440, %p441
      %s443 = ssub.s32 %s28, %s35
      %p444 = scmp.eq.s32.totalorder %s443, 0
      %s446 = sadd.s32 %s445, 1
      %s447 = scalar_select %p444, %s445, %s446
      %p450 = pneg %p444
      %p451 = scmp.eq.s32.totalorder %s28, 1
      %p452 = por %p450, %p451
      %p453 = scmp.ne.s32.totalorder %s445, %s448
      %p454 = scmp.eq.s32.totalorder %s28, 0
      %p455 = por %p453, %p454
      %p456 = scmp.ne.s32.totalorder %s445, %s448
      %p457 = scmp.eq.s32.totalorder %s33, 1
      %p458 = por %p456, %p457
      %p459 = scmp.ne.s32.totalorder %s448, %s449
      %p460 = scmp.eq.s32.totalorder %s33, 0
      %p461 = por %p459, %p460
      %p462 = scmp.ne.s32.totalorder %s448, %s449
      %p463 = scmp.eq.s32.totalorder %s34, 1
      %p464 = por %p462, %p463
      %p466 = scmp.ne.s32.totalorder %s449, %s465
      %p467 = scmp.eq.s32.totalorder %s34, 0
      %p468 = por %p466, %p467
      %s469 = ssub.s32 %s28, %s35
      %p470 = scmp.eq.s32.totalorder %s469, 0
      %s472 = sadd.s32 %s471, 1
      %s473 = scalar_select %p470, %s471, %s472
      %p476 = pneg %p470
      %p477 = scmp.eq.s32.totalorder %s28, 1
      %p478 = por %p476, %p477
      %p479 = scmp.ne.s32.totalorder %s471, %s474
      %p480 = scmp.eq.s32.totalorder %s28, 0
      %p481 = por %p479, %p480
      %p482 = scmp.ne.s32.totalorder %s471, %s474
      %p483 = scmp.eq.s32.totalorder %s33, 1
      %p484 = por %p482, %p483
      %p485 = scmp.ne.s32.totalorder %s474, %s475
      %p486 = scmp.eq.s32.totalorder %s33, 0
      %p487 = por %p485, %p486
      %p488 = scmp.ne.s32.totalorder %s474, %s475
      %p489 = scmp.eq.s32.totalorder %s34, 1
      %p490 = por %p488, %p489
      %p492 = scmp.ne.s32.totalorder %s475, %s491
      %p493 = scmp.eq.s32.totalorder %s34, 0
      %p494 = por %p492, %p493
      %s495 = ssub.s32 %s28, %s35
      %p496 = scmp.eq.s32.totalorder %s495, 0
      %s498 = sadd.s32 %s497, 1
      %s499 = scalar_select %p496, %s497, %s498
      %p502 = pneg %p496
      %p503 = scmp.eq.s32.totalorder %s28, 1
      %p504 = por %p502, %p503
      %p505 = scmp.ne.s32.totalorder %s497, %s500
      %p506 = scmp.eq.s32.totalorder %s28, 0
      %p507 = por %p505, %p506
      %p508 = scmp.ne.s32.totalorder %s497, %s500
      %p509 = scmp.eq.s32.totalorder %s33, 1
      %p510 = por %p508, %p509
      %p511 = scmp.ne.s32.totalorder %s500, %s501
      %p512 = scmp.eq.s32.totalorder %s33, 0
      %p513 = por %p511, %p512
      %p514 = scmp.ne.s32.totalorder %s500, %s501
      %p515 = scmp.eq.s32.totalorder %s34, 1
      %p516 = por %p514, %p515
      %p518 = scmp.ne.s32.totalorder %s501, %s517
      %p519 = scmp.eq.s32.totalorder %s34, 0
      %p520 = por %p518, %p519
      %s521 = ssub.s32 %s28, %s35
      %p522 = scmp.eq.s32.totalorder %s521, 0
      %s524 = sadd.s32 %s523, 1
      %s525 = scalar_select %p522, %s523, %s524
      %p528 = pneg %p522
      %p529 = scmp.eq.s32.totalorder %s28, 1
      %p530 = por %p528, %p529
      %p531 = scmp.ne.s32.totalorder %s523, %s526
      %p532 = scmp.eq.s32.totalorder %s28, 0
      %p533 = por %p531, %p532
      %p534 = scmp.ne.s32.totalorder %s523, %s526
      %p535 = scmp.eq.s32.totalorder %s33, 1
      %p536 = por %p534, %p535
      %p537 = scmp.ne.s32.totalorder %s526, %s527
      %p538 = scmp.eq.s32.totalorder %s33, 0
      %p539 = por %p537, %p538
      %p540 = scmp.ne.s32.totalorder %s526, %s527
      %p541 = scmp.eq.s32.totalorder %s34, 1
      %p542 = por %p540, %p541
      %p544 = scmp.ne.s32.totalorder %s527, %s543
      %p545 = scmp.eq.s32.totalorder %s34, 0
      %p546 = por %p544, %p545
      %s548 = sadd.s32 %s547, 1
      %p551 = scmp.eq.s32.totalorder %s28, 1
      %p552 = scmp.ne.s32.totalorder %s547, %s549
      %p553 = scmp.eq.s32.totalorder %s28, 0
      %p554 = por %p552, %p553
      %p555 = scmp.ne.s32.totalorder %s547, %s549
      %p556 = scmp.eq.s32.totalorder %s33, 1
      %p557 = por %p555, %p556
      %p558 = scmp.ne.s32.totalorder %s549, %s550
      %p559 = scmp.eq.s32.totalorder %s33, 0
      %p560 = por %p558, %p559
      %p561 = scmp.ne.s32.totalorder %s549, %s550
      %p562 = scmp.eq.s32.totalorder %s34, 1
      %p563 = por %p561, %p562
      %p565 = scmp.ne.s32.totalorder %s550, %s564
      %p566 = scmp.eq.s32.totalorder %s34, 0
      %p567 = por %p565, %p566
      %p568 = scmp.le.s32.totalorder 1, %s28
      %p569 = scmp.lt.s32.totalorder %s28, 3
      %p570 = pnand %p568, %p569
      %p571 = pneg %p570
      // Predicated region
      $region9: #{tpu_custom_call.1} parent=5 // pred_check
        _
      $region10: #{tpu_custom_call.1} parent=5 // pred_check_branch
        %573 = sbr.rel (%p570) target = $region12
      $region11: #{tpu_custom_call.1} parent=5 // pred_region
        %s574 = ssub.s32 %s28, 1
        // Predicated region
        $region13: #{tpu_custom_call.1} parent=11 // pred_check
          %p575 = pneg %p49
        $region14: #{tpu_custom_call.1} parent=11 // pred_check_branch
          %577 = sbr.rel (%p575) target = $region16
        $region15: #{tpu_custom_call.1} parent=11 // pred_region
          _
        $region16: #{tpu_custom_call.1} parent=11 // pred_fallthru
          _
        // Predicated region
        $region17: #{tpu_custom_call.1} parent=11 // pred_check
          %p578 = pneg %p70
        $region18: #{tpu_custom_call.1} parent=11 // pred_check_branch
          %580 = sbr.rel (%p578) target = $region20
        $region19: #{tpu_custom_call.1} parent=11 // pred_region
          _
        $region20: #{tpu_custom_call.1} parent=11 // pred_fallthru
          _
        // Predicated region
        $region21: #{tpu_custom_call.1} parent=11 // pred_check
          %p581 = pneg %p91
        $region22: #{tpu_custom_call.1} parent=11 // pred_check_branch
          %583 = sbr.rel (%p581) target = $region24
        $region23: #{tpu_custom_call.1} parent=11 // pred_region
          _
        $region24: #{tpu_custom_call.1} parent=11 // pred_fallthru
          _
        // Predicated region
        $region25: #{tpu_custom_call.1} parent=11 // pred_check
          %p584 = pneg %p112
        $region26: #{tpu_custom_call.1} parent=11 // pred_check_branch
          %586 = sbr.rel (%p584) target = $region28
        $region27: #{tpu_custom_call.1} parent=11 // pred_region
          _
        $region28: #{tpu_custom_call.1} parent=11 // pred_fallthru
          _
        // Predicated region
        $region29: #{tpu_custom_call.1} parent=11 // pred_check
          %p587 = pneg %p133
        $region30: #{tpu_custom_call.1} parent=11 // pred_check_branch
          %589 = sbr.rel (%p587) target = $region32
        $region31: #{tpu_custom_call.1} parent=11 // pred_region
          _
        $region32: #{tpu_custom_call.1} parent=11 // pred_fallthru
          _
        // Predicated region
        $region33: #{tpu_custom_call.1} parent=11 // pred_check
          %p590 = pneg %p154
        $region34: #{tpu_custom_call.1} parent=11 // pred_check_branch
          %592 = sbr.rel (%p590) target = $region36
        $region35: #{tpu_custom_call.1} parent=11 // pred_region
          _
        $region36: #{tpu_custom_call.1} parent=11 // pred_fallthru
          _
        // Predicated region
        $region37: #{tpu_custom_call.1} parent=11 // pred_check
          %p593 = pneg %p175
        $region38: #{tpu_custom_call.1} parent=11 // pred_check_branch
          %595 = sbr.rel (%p593) target = $region40
        $region39: #{tpu_custom_call.1} parent=11 // pred_region
          _
        $region40: #{tpu_custom_call.1} parent=11 // pred_fallthru
          _
      $region12: #{tpu_custom_call.1} parent=5 // pred_fallthru
        _
      %p596 = scmp.lt.s32.totalorder %s28, 2
      // Predicated region
      $region41: #{tpu_custom_call.1} parent=5 // pred_check
        %p597 = pneg %p596
      $region42: #{tpu_custom_call.1} parent=5 // pred_check_branch
        %599 = sbr.rel (%p597) target = $region44
      $region43: #{tpu_custom_call.1} parent=5 // pred_region
        // Predicated region
        $region45: #{tpu_custom_call.1} parent=43 // pred_check
          %p600 = pneg %p195
        $region46: #{tpu_custom_call.1} parent=43 // pred_check_branch
          %602 = sbr.rel (%p600) target = $region48
        $region47: #{tpu_custom_call.1} parent=43 // pred_region
          %p603 = scmp.lt.s32.totalorder %s28, 1
          %s604 = scalar_select %p603, %s28, 1
          %s605 = scalar_lea.vmem %s7, %s604
        $region48: #{tpu_custom_call.1} parent=43 // pred_fallthru
          _
        // Predicated region
        $region49: #{tpu_custom_call.1} parent=43 // pred_check
          %p606 = pneg %p221
        $region50: #{tpu_custom_call.1} parent=43 // pred_check_branch
          %608 = sbr.rel (%p606) target = $region52
        $region51: #{tpu_custom_call.1} parent=43 // pred_region
          %p609 = scmp.lt.s32.totalorder %s28, 1
          %s610 = scalar_select %p609, %s28, 1
          %s611 = scalar_lea.vmem %s8, %s610
        $region52: #{tpu_custom_call.1} parent=43 // pred_fallthru
          _
        // Predicated region
        $region53: #{tpu_custom_call.1} parent=43 // pred_check
          %p612 = pneg %p247
        $region54: #{tpu_custom_call.1} parent=43 // pred_check_branch
          %614 = sbr.rel (%p612) target = $region56
        $region55: #{tpu_custom_call.1} parent=43 // pred_region
          %p615 = scmp.lt.s32.totalorder %s28, 1
          %s616 = scalar_select %p615, %s28, 1
          %s617 = smul.addr %s616, 16
          %s618 = smul.addr %s617, 8
          %s619 = scalar_lea.vmem %s9, %s618
        $region56: #{tpu_custom_call.1} parent=43 // pred_fallthru
          _
        // Predicated region
        $region57: #{tpu_custom_call.1} parent=43 // pred_check
          %p620 = pneg %p273
        $region58: #{tpu_custom_call.1} parent=43 // pred_check_branch
          %622 = sbr.rel (%p620) target = $region60
        $region59: #{tpu_custom_call.1} parent=43 // pred_region
          %p623 = scmp.lt.s32.totalorder %s28, 1
          %s624 = scalar_select %p623, %s28, 1
          %s625 = smul.addr %s624, 8
          %s626 = smul.addr %s625, 8
          %s627 = scalar_lea.vmem %s10, %s626
        $region60: #{tpu_custom_call.1} parent=43 // pred_fallthru
          _
        // Predicated region
        $region61: #{tpu_custom_call.1} parent=43 // pred_check
          %p628 = pneg %p299
        $region62: #{tpu_custom_call.1} parent=43 // pred_check_branch
          %630 = sbr.rel (%p628) target = $region64
        $region63: #{tpu_custom_call.1} parent=43 // pred_region
          %p631 = scmp.lt.s32.totalorder %s28, 1
          %s632 = scalar_select %p631, %s28, 1
          %s633 = smul.addr %s632, 16
          %s634 = smul.addr %s633, 8
          %s635 = scalar_lea.vmem %s11, %s634
        $region64: #{tpu_custom_call.1} parent=43 // pred_fallthru
          _
        // Predicated region
        $region65: #{tpu_custom_call.1} parent=43 // pred_check
          %p636 = pneg %p325
        $region66: #{tpu_custom_call.1} parent=43 // pred_check_branch
          %638 = sbr.rel (%p636) target = $region68
        $region67: #{tpu_custom_call.1} parent=43 // pred_region
          %p639 = scmp.lt.s32.totalorder %s28, 1
          %s640 = scalar_select %p639, %s28, 1
          %s641 = smul.addr %s640, 8
          %s642 = smul.addr %s641, 8
          %s643 = scalar_lea.vmem %s12, %s642
        $region68: #{tpu_custom_call.1} parent=43 // pred_fallthru
          _
        // Predicated region
        $region69: #{tpu_custom_call.1} parent=43 // pred_check
          %p644 = pneg %p351
        $region70: #{tpu_custom_call.1} parent=43 // pred_check_branch
          %646 = sbr.rel (%p644) target = $region72
        $region71: #{tpu_custom_call.1} parent=43 // pred_region
          %p647 = scmp.lt.s32.totalorder %s28, 1
          %s648 = scalar_select %p647, %s28, 1
          %s649 = smul.addr %s648, 16
          %s650 = smul.addr %s649, 8
          %s651 = scalar_lea.vmem %s13, %s650
        $region72: #{tpu_custom_call.1} parent=43 // pred_fallthru
          _
        // Predicated region
        $region73: #{tpu_custom_call.1} parent=43 // pred_check
          %p652 = pneg %p377
        $region74: #{tpu_custom_call.1} parent=43 // pred_check_branch
          %654 = sbr.rel (%p652) target = $region76
        $region75: #{tpu_custom_call.1} parent=43 // pred_region
          %p655 = scmp.lt.s32.totalorder %s28, 1
          %s656 = scalar_select %p655, %s28, 1
          %s657 = scalar_lea.vmem %s14, %s656
        $region76: #{tpu_custom_call.1} parent=43 // pred_fallthru
          _
        // Predicated region
        $region77: #{tpu_custom_call.1} parent=43 // pred_check
          %p658 = pneg %p403
        $region78: #{tpu_custom_call.1} parent=43 // pred_check_branch
          %660 = sbr.rel (%p658) target = $region80
        $region79: #{tpu_custom_call.1} parent=43 // pred_region
          %p661 = scmp.lt.s32.totalorder %s28, 1
          %s662 = scalar_select %p661, %s28, 1
          %s663 = scalar_lea.vmem %s15, %s662
        $region80: #{tpu_custom_call.1} parent=43 // pred_fallthru
          _
        // Predicated region
        $region81: #{tpu_custom_call.1} parent=43 // pred_check
          %p664 = pneg %p429
        $region82: #{tpu_custom_call.1} parent=43 // pred_check_branch
          %666 = sbr.rel (%p664) target = $region84
        $region83: #{tpu_custom_call.1} parent=43 // pred_region
          %p667 = scmp.lt.s32.totalorder %s28, 1
          %s668 = scalar_select %p667, %s28, 1
          %s669 = scalar_lea.vmem %s16, %s668
        $region84: #{tpu_custom_call.1} parent=43 // pred_fallthru
          _
        // Predicated region
        $region85: #{tpu_custom_call.1} parent=43 // pred_check
          %p670 = pneg %p455
        $region86: #{tpu_custom_call.1} parent=43 // pred_check_branch
          %672 = sbr.rel (%p670) target = $region88
        $region87: #{tpu_custom_call.1} parent=43 // pred_region
          %p673 = scmp.lt.s32.totalorder %s28, 1
          %s674 = scalar_select %p673, %s28, 1
          %s675 = smul.addr %s674, 4
          %s676 = smul.addr %s675, 8
          %s677 = scalar_lea.vmem %s17, %s676
        $region88: #{tpu_custom_call.1} parent=43 // pred_fallthru
          _
        // Predicated region
        $region89: #{tpu_custom_call.1} parent=43 // pred_check
          %p678 = pneg %p481
        $region90: #{tpu_custom_call.1} parent=43 // pred_check_branch
          %680 = sbr.rel (%p678) target = $region92
        $region91: #{tpu_custom_call.1} parent=43 // pred_region
          %p681 = scmp.lt.s32.totalorder %s28, 1
          %s682 = scalar_select %p681, %s28, 1
          %s683 = scalar_lea.vmem %s18, %s682
        $region92: #{tpu_custom_call.1} parent=43 // pred_fallthru
          _
        // Predicated region
        $region93: #{tpu_custom_call.1} parent=43 // pred_check
          %p684 = pneg %p507
        $region94: #{tpu_custom_call.1} parent=43 // pred_check_branch
          %686 = sbr.rel (%p684) target = $region96
        $region95: #{tpu_custom_call.1} parent=43 // pred_region
          %p687 = scmp.lt.s32.totalorder %s28, 1
          %s688 = scalar_select %p687, %s28, 1
          %s689 = smul.addr %s688, 16
          %s690 = smul.addr %s689, 8
          %s691 = scalar_lea.vmem %s19, %s690
        $region96: #{tpu_custom_call.1} parent=43 // pred_fallthru
          _
        // Predicated region
        $region97: #{tpu_custom_call.1} parent=43 // pred_check
          %p692 = pneg %p533
        $region98: #{tpu_custom_call.1} parent=43 // pred_check_branch
          %694 = sbr.rel (%p692) target = $region100
        $region99: #{tpu_custom_call.1} parent=43 // pred_region
          %p695 = scmp.lt.s32.totalorder %s28, 1
          %s696 = scalar_select %p695, %s28, 1
          %s697 = scalar_lea.vmem %s20, %s696
        $region100: #{tpu_custom_call.1} parent=43 // pred_fallthru
          _
      $region44: #{tpu_custom_call.1} parent=5 // pred_fallthru
        _
      %p698 = scmp.le.s32.totalorder 1, %s28
      %p699 = scmp.lt.s32.totalorder %s28, 3
      %p700 = pnand %p698, %p699
      %p701 = pneg %p700
      // Predicated region
      $region101: #{tpu_custom_call.1} parent=5 // pred_check
        _
      $region102: #{tpu_custom_call.1} parent=5 // pred_check_branch
        %703 = sbr.rel (%p700) target = $region104
      $region103: #{tpu_custom_call.1} parent=5 // pred_region
        %s704 = ssub.s32 %s28, 1
        %p705 = pneg %p49
        %p706 = pneg %p46
        %p707 = pneg %p70
        %p708 = pneg %p67
        %p709 = pneg %p91
        %p710 = pneg %p88
        %p711 = pneg %p112
        %p712 = pneg %p109
        %p713 = pneg %p133
        %p714 = pneg %p130
        %p715 = pneg %p154
        %p716 = pneg %p151
        %p717 = pneg %p175
        %p718 = pneg %p172
        %p719 = scmp.lt.s32.totalorder %s33, 1
        %s720 = scalar_select %p719, %s33, 1
        %s721 = scalar_lea.vmem %s7, %s720
        %p722 = pneg %p201
        %p723 = pneg %p198
        %p724 = scmp.lt.s32.totalorder %s33, 1
        %s725 = scalar_select %p724, %s33, 1
        %s726 = scalar_lea.vmem %s8, %s725
        %p727 = pneg %p227
        %p728 = pneg %p224
        %p729 = scmp.lt.s32.totalorder %s33, 1
        %s730 = scalar_select %p729, %s33, 1
        %s731 = smul.addr %s730, 16
        %s732 = smul.addr %s731, 8
        %s733 = scalar_lea.vmem %s9, %s732
        %p734 = pneg %p253
        %p735 = pneg %p250
        %p736 = scmp.lt.s32.totalorder %s33, 1
        %s737 = scalar_select %p736, %s33, 1
        %s738 = smul.addr %s737, 8
        %s739 = smul.addr %s738, 8
        %s740 = scalar_lea.vmem %s10, %s739
        %p741 = pneg %p279
        %p742 = pneg %p276
        %p743 = scmp.lt.s32.totalorder %s33, 1
        %s744 = scalar_select %p743, %s33, 1
        %s745 = smul.addr %s744, 16
        %s746 = smul.addr %s745, 8
        %s747 = scalar_lea.vmem %s11, %s746
        %p748 = pneg %p305
        %p749 = pneg %p302
        %p750 = scmp.lt.s32.totalorder %s33, 1
        %s751 = scalar_select %p750, %s33, 1
        %s752 = smul.addr %s751, 8
        %s753 = smul.addr %s752, 8
        %s754 = scalar_lea.vmem %s12, %s753
        %p755 = pneg %p331
        %p756 = pneg %p328
        %p757 = scmp.lt.s32.totalorder %s33, 1
        %s758 = scalar_select %p757, %s33, 1
        %s759 = smul.addr %s758, 16
        %s760 = smul.addr %s759, 8
        %s761 = scalar_lea.vmem %s13, %s760
        %p762 = pneg %p357
        %p763 = pneg %p354
        %p764 = scmp.lt.s32.totalorder %s33, 1
        %s765 = scalar_select %p764, %s33, 1
        %s766 = scalar_lea.vmem %s14, %s765
        %p767 = pneg %p383
        %p768 = pneg %p380
        %p769 = scmp.lt.s32.totalorder %s33, 1
        %s770 = scalar_select %p769, %s33, 1
        %s771 = scalar_lea.vmem %s15, %s770
        %p772 = pneg %p409
        %p773 = pneg %p406
        %p774 = scmp.lt.s32.totalorder %s33, 1
        %s775 = scalar_select %p774, %s33, 1
        %s776 = scalar_lea.vmem %s16, %s775
        %p777 = pneg %p435
        %p778 = pneg %p432
        %p779 = scmp.lt.s32.totalorder %s33, 1
        %s780 = scalar_select %p779, %s33, 1
        %s781 = smul.addr %s780, 4
        %s782 = smul.addr %s781, 8
        %s783 = scalar_lea.vmem %s17, %s782
        %p784 = pneg %p461
        %p785 = pneg %p458
        %p786 = scmp.lt.s32.totalorder %s33, 1
        %s787 = scalar_select %p786, %s33, 1
        %s788 = scalar_lea.vmem %s18, %s787
        %p789 = pneg %p487
        %p790 = pneg %p484
        %p791 = scmp.lt.s32.totalorder %s33, 1
        %s792 = scalar_select %p791, %s33, 1
        %s793 = smul.addr %s792, 16
        %s794 = smul.addr %s793, 8
        %s795 = scalar_lea.vmem %s19, %s794
        %p796 = pneg %p513
        %p797 = pneg %p510
        %p798 = scmp.lt.s32.totalorder %s33, 1
        %s799 = scalar_select %p798, %s33, 1
        %s800 = scalar_lea.vmem %s20, %s799
        %p801 = pneg %p539
        %p802 = pneg %p536
        %p803 = pneg %p560
        %p804 = pneg %p557
        %p805 = scmp.lt.s32.totalorder %s33, 1
        %s806 = scalar_select %p805, %s33, 1
        %s807 = scalar_lea.vmem %s7, %s806
        %p808 = scmp.lt.s32.totalorder %s33, 1
        %s809 = scalar_select %p808, %s33, 1
        %s810 = scalar_lea.vmem %s8, %s809
        %p811 = scmp.lt.s32.totalorder %s33, 1
        %s812 = scalar_select %p811, %s33, 1
        %s813 = smul.addr %s812, 16
        %s814 = smul.addr %s813, 8
        %s815 = scalar_lea.vmem %s9, %s814
        %p816 = scmp.lt.s32.totalorder %s33, 1
        %s817 = scalar_select %p816, %s33, 1
        %s818 = smul.addr %s817, 8
        %s819 = smul.addr %s818, 8
        %s820 = scalar_lea.vmem %s10, %s819
        %p821 = scmp.lt.s32.totalorder %s33, 1
        %s822 = scalar_select %p821, %s33, 1
        %s823 = smul.addr %s822, 16
        %s824 = smul.addr %s823, 8
        %s825 = scalar_lea.vmem %s11, %s824
        %p826 = scmp.lt.s32.totalorder %s33, 1
        %s827 = scalar_select %p826, %s33, 1
        %s828 = smul.addr %s827, 8
        %s829 = smul.addr %s828, 8
        %s830 = scalar_lea.vmem %s12, %s829
        %p831 = scmp.lt.s32.totalorder %s33, 1
        %s832 = scalar_select %p831, %s33, 1
        %s833 = smul.addr %s832, 16
        %s834 = smul.addr %s833, 8
        %s835 = scalar_lea.vmem %s13, %s834
        %p836 = scmp.lt.s32.totalorder %s33, 1
        %s837 = scalar_select %p836, %s33, 1
        %s838 = scalar_lea.vmem %s14, %s837
        %p839 = scmp.lt.s32.totalorder %s33, 1
        %s840 = scalar_select %p839, %s33, 1
        %s841 = scalar_lea.vmem %s15, %s840
        %p842 = scmp.lt.s32.totalorder %s33, 1
        %s843 = scalar_select %p842, %s33, 1
        %s844 = scalar_lea.vmem %s16, %s843
        %p845 = scmp.lt.s32.totalorder %s33, 1
        %s846 = scalar_select %p845, %s33, 1
        %s847 = smul.addr %s846, 4
        %s848 = smul.addr %s847, 8
        %s849 = scalar_lea.vmem %s17, %s848
        %p850 = scmp.lt.s32.totalorder %s33, 1
        %s851 = scalar_select %p850, %s33, 1
        %s852 = scalar_lea.vmem %s18, %s851
        %p853 = scmp.lt.s32.totalorder %s33, 1
        %s854 = scalar_select %p853, %s33, 1
        %s855 = smul.addr %s854, 16
        %s856 = smul.addr %s855, 8
        %s857 = scalar_lea.vmem %s19, %s856
        %p858 = scmp.lt.s32.totalorder %s33, 1
        %s859 = scalar_select %p858, %s33, 1
        %s860 = scalar_lea.vmem %s20, %s859
        %p861 = scmp.eq.s32.totalorder %s33, 0
        // Predicated region
        $region105: #{tpu_custom_call.1} parent=103 // pred_check
          %p862 = pneg %p861
        $region106: #{tpu_custom_call.1} parent=103 // pred_check_branch
          %864 = sbr.rel (%p862) target = $region108
        $region107: #{tpu_custom_call.1} parent=103 // pred_region
          %v865 = vld [vmem:[%s0] sm:$0xff]
          %v866 = vld [vmem:[%s0 + $0x8] sm:$0xff]
          %vm867 = vcmask 261120
          %868 = vst.msk [vmem:[#allocation2] sm:$0xff] %vm867, %v865
          %869 = vst.msk [vmem:[#allocation2 + $0x8] sm:$0xff] %vm867, %v866
        $region108: #{tpu_custom_call.1} parent=103 // pred_fallthru
          _
        %v870 = vld [vmem:[#allocation2] sm:$0xff]
        %v871 = vld [vmem:[#allocation2 + $0x8] sm:$0xff]
        %v872 = vld [vmem:[%s807] sm:$0x1]
        %v873 = vld [vmem:[%s810] sm:$0x1]
        %vm874 = vcmask 261120
        %v875 = vsel %vm874, %v870, 0.0
        %876 = vadd.xlane.f32.xlu0 %v875
        %v877 = vpop.xlane.xlu0 %876
        %v878 = vsel %vm874, %v871, 0.0
        %879 = vadd.xlane.f32.xlu0 %v878
        %v880 = vpop.xlane.xlu0 %879
        %v881 = vrcp.pop 32.0
        %v882 = vmul.f32 %v877, %v881
        %v883 = vmul.f32 %v880, %v881
        %v884 = vsub.f32 %v870, %v882
        %v885 = vsub.f32 %v871, %v883
        %v886 = vmul.f32 %v884, %v884
        %v887 = vmul.f32 %v885, %v885
        %v888 = vsel %vm874, %v886, 0.0
        %889 = vadd.xlane.f32.xlu0 %v888
        %v890 = vpop.xlane.xlu0 %889
        %v891 = vsel %vm874, %v887, 0.0
        %892 = vadd.xlane.f32.xlu0 %v891
        %v893 = vpop.xlane.xlu0 %892
        %v894 = vmul.f32 %v890, %v881
        %v895 = vmul.f32 %v893, %v881
        %v896 = vadd.f32 %v894, 1e-05
        %v897 = vadd.f32 %v895, 1e-05
        %v898 = vrsqrt.pop %v896
        %v899 = vrsqrt.pop %v897
        %v900 = vmul.f32 %v884, %v898
        %v901 = vmul.f32 %v885, %v899
        %v903 = vlaneseq
        %v904 = vshrl.u32 %v903, 7
        %v905 = vsub.s32 0, %v904
        %v906 = vrot.slane %v872, %v905
        %v908 = vmul.f32 %v900, %v906
        %v909 = vmul.f32 %v901, %v906
        %v911 = vlaneseq
        %v912 = vshrl.u32 %v911, 7
        %v913 = vsub.s32 0, %v912
        %v914 = vrot.slane %v873, %v913
        %v916 = vadd.f32 %v908, %v914
        %v917 = vadd.f32 %v909, %v914
        %920 = vrot.lane.b32.xlu0 %v916, 32
        %v921 = vpop.permute.xlu0 %920
        %922 = vrot.lane.b32.xlu0 %v917, 32
        %v923 = vpop.permute.xlu0 %922
        %926 = vrot.lane.b32.xlu0 %v916, 64
        %v927 = vpop.permute.xlu0 %926
        %928 = vrot.lane.b32.xlu0 %v917, 64
        %v929 = vpop.permute.xlu0 %928
        %932 = vrot.lane.b32.xlu0 %v916, 96
        %v933 = vpop.permute.xlu0 %932
        %934 = vrot.lane.b32.xlu0 %v917, 96
        %v935 = vpop.permute.xlu0 %934
        %v938 = vsel %vm874, %v916, %v921
        %v939 = vsel %vm874, %v917, %v923
        %vm940 = vcmask 523264
        %v941 = vsel %vm940, %v938, %v927
        %v942 = vsel %vm940, %v939, %v929
        %vm943 = vcmask 785408
        %v944 = vsel %vm943, %v941, %v933
        %v945 = vsel %vm943, %v942, %v935
        %v946 = vld [vmem:[%s1] sm:$0xff]
        %v947 = vld [vmem:[%s1 + $0x8] sm:$0xff]
        %v948 = vld [vmem:[%s1 + $0x10] sm:$0xff]
        %v949 = vld [vmem:[%s1 + $0x18] sm:$0xff]
        %v950 = vld [vmem:[%s1 + $0x20] sm:$0xff]
        %v951 = vld [vmem:[%s1 + $0x28] sm:$0xff]
        %v952 = vld [vmem:[%s1 + $0x30] sm:$0xff]
        %v953 = vld [vmem:[%s1 + $0x38] sm:$0xff]
        %v954 = vmul.f32 %v944, %v946
        %v955 = vmul.f32 %v945, %v947
        %v956 = vmul.f32 %v944, %v948
        %v957 = vmul.f32 %v945, %v949
        %v958 = vmul.f32 %v944, %v950
        %v959 = vmul.f32 %v945, %v951
        %v960 = vmul.f32 %v944, %v952
        %v961 = vmul.f32 %v945, %v953
        %v962 = vld [vmem:[%s815] sm:$0xff]
        %v963 = vld [vmem:[%s815 + $0x8] sm:$0xff]
        %v964 = vld [vmem:[%s815 + $0x10] sm:$0xff]
        %v965 = vld [vmem:[%s815 + $0x18] sm:$0xff]
        %v966 = vld [vmem:[%s815 + $0x20] sm:$0xff]
        %v967 = vld [vmem:[%s815 + $0x28] sm:$0xff]
        %v968 = vld [vmem:[%s815 + $0x30] sm:$0xff]
        %v969 = vld [vmem:[%s815 + $0x38] sm:$0xff]
        %v970 = vld [vmem:[%s815 + $0x40] sm:$0xff]
        %v971 = vld [vmem:[%s815 + $0x48] sm:$0xff]
        %v972 = vld [vmem:[%s815 + $0x50] sm:$0xff]
        %v973 = vld [vmem:[%s815 + $0x58] sm:$0xff]
        %v974 = vld [vmem:[%s815 + $0x60] sm:$0xff]
        %v975 = vld [vmem:[%s815 + $0x68] sm:$0xff]
        %v976 = vld [vmem:[%s815 + $0x70] sm:$0xff]
        %v977 = vld [vmem:[%s815 + $0x78] sm:$0xff]
        %v978 = vld [vmem:[%s820] sm:$0xff]
        %v979 = vld [vmem:[%s820 + $0x8] sm:$0xff]
        %v980 = vld [vmem:[%s820 + $0x10] sm:$0xff]
        %v981 = vld [vmem:[%s820 + $0x18] sm:$0xff]
        %v982 = vld [vmem:[%s820 + $0x20] sm:$0xff]
        %v983 = vld [vmem:[%s820 + $0x28] sm:$0xff]
        %v984 = vld [vmem:[%s820 + $0x30] sm:$0xff]
        %v985 = vld [vmem:[%s820 + $0x38] sm:$0xff]
        %986 = vmatprep.subr.mxu0 0.0
        %987 = vmatpush1.msra.mxu0 %v962
        %988 = vmatprep.subr.mxu0 0.0
        %989 = vmatpush1.msra.mxu0 %v963
        %990 = vmatprep.subr.mxu0 0.0
        %991 = vmatpush1.msra.mxu0 %v964
        %992 = vmatprep.subr.mxu0 0.0
        %993 = vmatpush1.msra.mxu0 %v965
        %994 = vmatprep.subr.mxu0 0.0
        %995 = vmatpush1.msra.mxu0 %v966
        %996 = vmatprep.subr.mxu0 0.0
        %997 = vmatpush1.msra.mxu0 %v967
        %998 = vmatprep.subr.mxu0 0.0
        %999 = vmatpush1.msra.mxu0 %v968
        %1000 = vmatprep.subr.mxu0 0.0
        %1001 = vmatpush1.msra.mxu0 %v969
        %1002 = vmatprep.subr.mxu0 0.0
        %1003 = vmatpush1.msra.mxu0 %v970
        %1004 = vmatprep.subr.mxu0 0.0
        %1005 = vmatpush1.msra.mxu0 %v971
        %1006 = vmatprep.subr.mxu0 0.0
        %1007 = vmatpush1.msra.mxu0 %v972
        %1008 = vmatprep.subr.mxu0 0.0
        %1009 = vmatpush1.msra.mxu0 %v973
        %1010 = vmatprep.subr.mxu0 0.0
        %1011 = vmatpush1.msra.mxu0 %v974
        %1012 = vmatprep.subr.mxu0 0.0
        %1013 = vmatpush1.msra.mxu0 %v975
        %1014 = vmatprep.subr.mxu0 0.0
        %1015 = vmatpush1.msra.mxu0 %v976
        %1016 = vmatprep.subr.mxu0 0.0
        %1017 = vmatpush1.msra.mxu0 %v977
        %1018 = vmatprep.subr.mxu0 0.0
        %1019 = vmatpush1.msra.mxu0 0.0
        %1020 = vmatprep.subr.mxu0 0.0
        %1021 = vmatpush1.msra.mxu0 0.0
        %1022 = vmatprep.subr.mxu0 0.0
        %1023 = vmatpush1.msra.mxu0 0.0
        %1024 = vmatprep.subr.mxu0 0.0
        %1025 = vmatpush1.msra.mxu0 0.0
        %1026 = vmatprep.subr.mxu0 0.0
        %1027 = vmatpush1.msra.mxu0 0.0
        %1028 = vmatprep.subr.mxu0 0.0
        %1029 = vmatpush1.msra.mxu0 0.0
        %1030 = vmatprep.subr.mxu0 0.0
        %1031 = vmatpush1.msra.mxu0 0.0
        %1032 = vmatprep.subr.mxu0 0.0
        %1033 = vmatpush1.msra.mxu0 0.0
        %1034 = vmatprep.subr.mxu0 0.0
        %1035 = vmatpush1.msra.mxu0 0.0
        %1036 = vmatprep.subr.mxu0 0.0
        %1037 = vmatpush1.msra.mxu0 0.0
        %1038 = vmatprep.subr.mxu0 0.0
        %1039 = vmatpush1.msra.mxu0 0.0
        %1040 = vmatprep.subr.mxu0 0.0
        %1041 = vmatpush1.msra.mxu0 0.0
        %1042 = vmatprep.subr.mxu0 0.0
        %1043 = vmatpush1.msra.mxu0 0.0
        %1044 = vmatprep.subr.mxu0 0.0
        %1045 = vmatpush1.msra.mxu0 0.0
        %1046 = vmatprep.subr.mxu0 0.0
        %1047 = vmatpush1.msra.mxu0 0.0
        %1048 = vmatprep.subr.mxu0 0.0
        %1049 = vmatpush1.msra.mxu0 0.0
        %1050 = vmatprep.mubr.f32.mxu0 0.0
        %1051 = vmatmul.mubr.f32.gmra.mrb[0].mxu0 %v954
        %v1052 = vpop.f32.mrb[0].mxu0
        %v1053 = vadd.f32 %v978, %v1052
        %v1054 = vpop.f32.mrb[0].mxu0
        %1055 = vmatprep.mubr.f32.mxu0 0.0
        %1056 = vmatmul.mubr.f32.gmra.mrb[0].mxu0 %v955
        %v1057 = vpop.f32.mrb[0].mxu0
        %v1058 = vadd.f32 %v979, %v1057
        %v1059 = vpop.f32.mrb[0].mxu0
        %1060 = vmatprep.mubr.f32.mxu0 0.0
        %1061 = vmatmul.mubr.f32.gmra.mrb[0].mxu0 %v956
        %v1062 = vpop.f32.mrb[0].mxu0
        %v1063 = vadd.f32 %v980, %v1062
        %v1064 = vpop.f32.mrb[0].mxu0
        %1065 = vmatprep.mubr.f32.mxu0 0.0
        %1066 = vmatmul.mubr.f32.gmra.mrb[0].mxu0 %v957
        %v1067 = vpop.f32.mrb[0].mxu0
        %v1068 = vadd.f32 %v981, %v1067
        %v1069 = vpop.f32.mrb[0].mxu0
        %1070 = vmatprep.mubr.f32.mxu0 0.0
        %1071 = vmatmul.mubr.f32.gmra.mrb[0].mxu0 %v958
        %v1072 = vpop.f32.mrb[0].mxu0
        %v1073 = vadd.f32 %v982, %v1072
        %v1074 = vpop.f32.mrb[0].mxu0
        %1075 = vmatprep.mubr.f32.mxu0 0.0
        %1076 = vmatmul.mubr.f32.gmra.mrb[0].mxu0 %v959
        %v1077 = vpop.f32.mrb[0].mxu0
        %v1078 = vadd.f32 %v983, %v1077
        %v1079 = vpop.f32.mrb[0].mxu0
        %1080 = vmatprep.mubr.f32.mxu0 0.0
        %1081 = vmatmul.mubr.f32.gmra.mrb[0].mxu0 %v960
        %v1082 = vpop.f32.mrb[0].mxu0
        %v1083 = vadd.f32 %v984, %v1082
        %v1084 = vpop.f32.mrb[0].mxu0
        %1085 = vmatprep.mubr.f32.mxu0 0.0
        %1086 = vmatmul.mubr.f32.gmra.mrb[0].mxu0 %v961
        %v1087 = vpop.f32.mrb[0].mxu0
        %v1088 = vadd.f32 %v985, %v1087
        %v1089 = vpop.f32.mrb[0].mxu0
        %1090 = vdwg.mxu0
        %v1091 = vld [vmem:[%s825] sm:$0xff]
        %v1092 = vld [vmem:[%s825 + $0x8] sm:$0xff]
        %v1093 = vld [vmem:[%s825 + $0x10] sm:$0xff]
        %v1094 = vld [vmem:[%s825 + $0x18] sm:$0xff]
        %v1095 = vld [vmem:[%s825 + $0x20] sm:$0xff]
        %v1096 = vld [vmem:[%s825 + $0x28] sm:$0xff]
        %v1097 = vld [vmem:[%s825 + $0x30] sm:$0xff]
        %v1098 = vld [vmem:[%s825 + $0x38] sm:$0xff]
        %v1099 = vld [vmem:[%s825 + $0x40] sm:$0xff]
        %v1100 = vld [vmem:[%s825 + $0x48] sm:$0xff]
        %v1101 = vld [vmem:[%s825 + $0x50] sm:$0xff]
        %v1102 = vld [vmem:[%s825 + $0x58] sm:$0xff]
        %v1103 = vld [vmem:[%s825 + $0x60] sm:$0xff]
        %v1104 = vld [vmem:[%s825 + $0x68] sm:$0xff]
        %v1105 = vld [vmem:[%s825 + $0x70] sm:$0xff]
        %v1106 = vld [vmem:[%s825 + $0x78] sm:$0xff]
        %v1107 = vld [vmem:[%s830] sm:$0xff]
        %v1108 = vld [vmem:[%s830 + $0x8] sm:$0xff]
        %v1109 = vld [vmem:[%s830 + $0x10] sm:$0xff]
        %v1110 = vld [vmem:[%s830 + $0x18] sm:$0xff]
        %v1111 = vld [vmem:[%s830 + $0x20] sm:$0xff]
        %v1112 = vld [vmem:[%s830 + $0x28] sm:$0xff]
        %v1113 = vld [vmem:[%s830 + $0x30] sm:$0xff]
        %v1114 = vld [vmem:[%s830 + $0x38] sm:$0xff]
        %1115 = vmatprep.subr.mxu0 0.0
        %1116 = vmatpush1.msra.mxu0 %v1091
        %1117 = vmatprep.subr.mxu0 0.0
        %1118 = vmatpush1.msra.mxu0 %v1092
        %1119 = vmatprep.subr.mxu0 0.0
        %1120 = vmatpush1.msra.mxu0 %v1093
        %1121 = vmatprep.subr.mxu0 0.0
        %1122 = vmatpush1.msra.mxu0 %v1094
        %1123 = vmatprep.subr.mxu0 0.0
        %1124 = vmatpush1.msra.mxu0 %v1095
        %1125 = vmatprep.subr.mxu0 0.0
        %1126 = vmatpush1.msra.mxu0 %v1096
        %1127 = vmatprep.subr.mxu0 0.0
        %1128 = vmatpush1.msra.mxu0 %v1097
        %1129 = vmatprep.subr.mxu0 0.0
        %1130 = vmatpush1.msra.mxu0 %v1098
        %1131 = vmatprep.subr.mxu0 0.0
        %1132 = vmatpush1.msra.mxu0 %v1099
        %1133 = vmatprep.subr.mxu0 0.0
        %1134 = vmatpush1.msra.mxu0 %v1100
        %1135 = vmatprep.subr.mxu0 0.0
        %1136 = vmatpush1.msra.mxu0 %v1101
        %1137 = vmatprep.subr.mxu0 0.0
        %1138 = vmatpush1.msra.mxu0 %v1102
        %1139 = vmatprep.subr.mxu0 0.0
        %1140 = vmatpush1.msra.mxu0 %v1103
        %1141 = vmatprep.subr.mxu0 0.0
        %1142 = vmatpush1.msra.mxu0 %v1104
        %1143 = vmatprep.subr.mxu0 0.0
        %1144 = vmatpush1.msra.mxu0 %v1105
        %1145 = vmatprep.subr.mxu0 0.0
        %1146 = vmatpush1.msra.mxu0 %v1106
        %1147 = vmatprep.subr.mxu0 0.0
        %1148 = vmatpush1.msra.mxu0 0.0
        %1149 = vmatprep.subr.mxu0 0.0
        %1150 = vmatpush1.msra.mxu0 0.0
        %1151 = vmatprep.subr.mxu0 0.0
        %1152 = vmatpush1.msra.mxu0 0.0
        %1153 = vmatprep.subr.mxu0 0.0
        %1154 = vmatpush1.msra.mxu0 0.0
        %1155 = vmatprep.subr.mxu0 0.0
        %1156 = vmatpush1.msra.mxu0 0.0
        %1157 = vmatprep.subr.mxu0 0.0
        %1158 = vmatpush1.msra.mxu0 0.0
        %1159 = vmatprep.subr.mxu0 0.0
        %1160 = vmatpush1.msra.mxu0 0.0
        %1161 = vmatprep.subr.mxu0 0.0
        %1162 = vmatpush1.msra.mxu0 0.0
        %1163 = vmatprep.subr.mxu0 0.0
        %1164 = vmatpush1.msra.mxu0 0.0
        %1165 = vmatprep.subr.mxu0 0.0
        %1166 = vmatpush1.msra.mxu0 0.0
        %1167 = vmatprep.subr.mxu0 0.0
        %1168 = vmatpush1.msra.mxu0 0.0
        %1169 = vmatprep.subr.mxu0 0.0
        %1170 = vmatpush1.msra.mxu0 0.0
        %1171 = vmatprep.subr.mxu0 0.0
        %1172 = vmatpush1.msra.mxu0 0.0
        %1173 = vmatprep.subr.mxu0 0.0
        %1174 = vmatpush1.msra.mxu0 0.0
        %1175 = vmatprep.subr.mxu0 0.0
        %1176 = vmatpush1.msra.mxu0 0.0
        %1177 = vmatprep.subr.mxu0 0.0
        %1178 = vmatpush1.msra.mxu0 0.0
        %1179 = vmatprep.mubr.f32.mxu0 0.0
        %1180 = vmatmul.mubr.f32.gmra.mrb[0].mxu0 %v954
        %v1181 = vpop.f32.mrb[0].mxu0
        %v1182 = vadd.f32 %v1107, %v1181
        %v1183 = vpop.f32.mrb[0].mxu0
        %1184 = vmatprep.mubr.f32.mxu0 0.0
        %1185 = vmatmul.mubr.f32.gmra.mrb[0].mxu0 %v955
        %v1186 = vpop.f32.mrb[0].mxu0
        %v1187 = vadd.f32 %v1108, %v1186
        %v1188 = vpop.f32.mrb[0].mxu0
        %1189 = vmatprep.mubr.f32.mxu0 0.0
        %1190 = vmatmul.mubr.f32.gmra.mrb[0].mxu0 %v956
        %v1191 = vpop.f32.mrb[0].mxu0
        %v1192 = vadd.f32 %v1109, %v1191
        %v1193 = vpop.f32.mrb[0].mxu0
        %1194 = vmatprep.mubr.f32.mxu0 0.0
        %1195 = vmatmul.mubr.f32.gmra.mrb[0].mxu0 %v957
        %v1196 = vpop.f32.mrb[0].mxu0
        %v1197 = vadd.f32 %v1110, %v1196
        %v1198 = vpop.f32.mrb[0].mxu0
        %1199 = vmatprep.mubr.f32.mxu0 0.0
        %1200 = vmatmul.mubr.f32.gmra.mrb[0].mxu0 %v958
        %v1201 = vpop.f32.mrb[0].mxu0
        %v1202 = vadd.f32 %v1111, %v1201
        %v1203 = vpop.f32.mrb[0].mxu0
        %1204 = vmatprep.mubr.f32.mxu0 0.0
        %1205 = vmatmul.mubr.f32.gmra.mrb[0].mxu0 %v959
        %v1206 = vpop.f32.mrb[0].mxu0
        %v1207 = vadd.f32 %v1112, %v1206
        %v1208 = vpop.f32.mrb[0].mxu0
        %1209 = vmatprep.mubr.f32.mxu0 0.0
        %1210 = vmatmul.mubr.f32.gmra.mrb[0].mxu0 %v960
        %v1211 = vpop.f32.mrb[0].mxu0
        %v1212 = vadd.f32 %v1113, %v1211
        %v1213 = vpop.f32.mrb[0].mxu0
        %1214 = vmatprep.mubr.f32.mxu0 0.0
        %1215 = vmatmul.mubr.f32.gmra.mrb[0].mxu0 %v961
        %v1216 = vpop.f32.mrb[0].mxu0
        %v1217 = vadd.f32 %v1114, %v1216
        %v1218 = vpop.f32.mrb[0].mxu0
        %1219 = vdwg.mxu0
        %v1220 = vld [vmem:[%s835] sm:$0xff]
        %v1221 = vld [vmem:[%s835 + $0x8] sm:$0xff]
        %v1222 = vld [vmem:[%s835 + $0x10] sm:$0xff]
        %v1223 = vld [vmem:[%s835 + $0x18] sm:$0xff]
        %v1224 = vld [vmem:[%s835 + $0x20] sm:$0xff]
        %v1225 = vld [vmem:[%s835 + $0x28] sm:$0xff]
        %v1226 = vld [vmem:[%s835 + $0x30] sm:$0xff]
        %v1227 = vld [vmem:[%s835 + $0x38] sm:$0xff]
        %v1228 = vld [vmem:[%s835 + $0x40] sm:$0xff]
        %v1229 = vld [vmem:[%s835 + $0x48] sm:$0xff]
        %v1230 = vld [vmem:[%s835 + $0x50] sm:$0xff]
        %v1231 = vld [vmem:[%s835 + $0x58] sm:$0xff]
        %v1232 = vld [vmem:[%s835 + $0x60] sm:$0xff]
        %v1233 = vld [vmem:[%s835 + $0x68] sm:$0xff]
        %v1234 = vld [vmem:[%s835 + $0x70] sm:$0xff]
        %v1235 = vld [vmem:[%s835 + $0x78] sm:$0xff]
        %1236 = vmatprep.subr.mxu0 0.0
        %1237 = vmatpush1.msra.mxu0 %v1220
        %1238 = vmatprep.subr.mxu0 0.0
        %1239 = vmatpush1.msra.mxu0 %v1221
        %1240 = vmatprep.subr.mxu0 0.0
        %1241 = vmatpush1.msra.mxu0 %v1222
        %1242 = vmatprep.subr.mxu0 0.0
        %1243 = vmatpush1.msra.mxu0 %v1223
        %1244 = vmatprep.subr.mxu0 0.0
        %1245 = vmatpush1.msra.mxu0 %v1224
        %1246 = vmatprep.subr.mxu0 0.0
        %1247 = vmatpush1.msra.mxu0 %v1225
        %1248 = vmatprep.subr.mxu0 0.0
        %1249 = vmatpush1.msra.mxu0 %v1226
        %1250 = vmatprep.subr.mxu0 0.0
        %1251 = vmatpush1.msra.mxu0 %v1227
        %1252 = vmatprep.subr.mxu0 0.0
        %1253 = vmatpush1.msra.mxu0 %v1228
        %1254 = vmatprep.subr.mxu0 0.0
        %1255 = vmatpush1.msra.mxu0 %v1229
        %1256 = vmatprep.subr.mxu0 0.0
        %1257 = vmatpush1.msra.mxu0 %v1230
        %1258 = vmatprep.subr.mxu0 0.0
        %1259 = vmatpush1.msra.mxu0 %v1231
        %1260 = vmatprep.subr.mxu0 0.0
        %1261 = vmatpush1.msra.mxu0 %v1232
        %1262 = vmatprep.subr.mxu0 0.0
        %1263 = vmatpush1.msra.mxu0 %v1233
        %1264 = vmatprep.subr.mxu0 0.0
        %1265 = vmatpush1.msra.mxu0 %v1234
        %1266 = vmatprep.subr.mxu0 0.0
        %1267 = vmatpush1.msra.mxu0 %v1235
        %1268 = vmatprep.subr.mxu0 0.0
        %1269 = vmatpush1.msra.mxu0 0.0
        %1270 = vmatprep.subr.mxu0 0.0
        %1271 = vmatpush1.msra.mxu0 0.0
        %1272 = vmatprep.subr.mxu0 0.0
        %1273 = vmatpush1.msra.mxu0 0.0
        %1274 = vmatprep.subr.mxu0 0.0
        %1275 = vmatpush1.msra.mxu0 0.0
        %1276 = vmatprep.subr.mxu0 0.0
        %1277 = vmatpush1.msra.mxu0 0.0
        %1278 = vmatprep.subr.mxu0 0.0
        %1279 = vmatpush1.msra.mxu0 0.0
        %1280 = vmatprep.subr.mxu0 0.0
        %1281 = vmatpush1.msra.mxu0 0.0
        %1282 = vmatprep.subr.mxu0 0.0
        %1283 = vmatpush1.msra.mxu0 0.0
        %1284 = vmatprep.subr.mxu0 0.0
        %1285 = vmatpush1.msra.mxu0 0.0
        %1286 = vmatprep.subr.mxu0 0.0
        %1287 = vmatpush1.msra.mxu0 0.0
        %1288 = vmatprep.subr.mxu0 0.0
        %1289 = vmatpush1.msra.mxu0 0.0
        %1290 = vmatprep.subr.mxu0 0.0
        %1291 = vmatpush1.msra.mxu0 0.0
        %1292 = vmatprep.subr.mxu0 0.0
        %1293 = vmatpush1.msra.mxu0 0.0
        %1294 = vmatprep.subr.mxu0 0.0
        %1295 = vmatpush1.msra.mxu0 0.0
        %1296 = vmatprep.subr.mxu0 0.0
        %1297 = vmatpush1.msra.mxu0 0.0
        %1298 = vmatprep.subr.mxu0 0.0
        %1299 = vmatpush1.msra.mxu0 0.0
        %1300 = vmatprep.mubr.f32.mxu0 0.0
        %1301 = vmatmul.mubr.f32.gmra.mrb[0].mxu0 %v954
        %v1302 = vpop.f32.mrb[0].mxu0
        %v1303 = vadd.f32 0.0, %v1302
        %v1304 = vpop.f32.mrb[0].mxu0
        %1305 = vmatprep.mubr.f32.mxu0 0.0
        %1306 = vmatmul.mubr.f32.gmra.mrb[0].mxu0 %v955
        %v1307 = vpop.f32.mrb[0].mxu0
        %v1308 = vadd.f32 0.0, %v1307
        %v1309 = vpop.f32.mrb[0].mxu0
        %1310 = vmatprep.mubr.f32.mxu0 0.0
        %1311 = vmatmul.mubr.f32.gmra.mrb[0].mxu0 %v956
        %v1312 = vpop.f32.mrb[0].mxu0
        %v1313 = vadd.f32 0.0, %v1312
        %v1314 = vpop.f32.mrb[0].mxu0
        %1315 = vmatprep.mubr.f32.mxu0 0.0
        %1316 = vmatmul.mubr.f32.gmra.mrb[0].mxu0 %v957
        %v1317 = vpop.f32.mrb[0].mxu0
        %v1318 = vadd.f32 0.0, %v1317
        %v1319 = vpop.f32.mrb[0].mxu0
        %1320 = vmatprep.mubr.f32.mxu0 0.0
        %1321 = vmatmul.mubr.f32.gmra.mrb[0].mxu0 %v958
        %v1322 = vpop.f32.mrb[0].mxu0
        %v1323 = vadd.f32 0.0, %v1322
        %v1324 = vpop.f32.mrb[0].mxu0
        %1325 = vmatprep.mubr.f32.mxu0 0.0
        %1326 = vmatmul.mubr.f32.gmra.mrb[0].mxu0 %v959
        %v1327 = vpop.f32.mrb[0].mxu0
        %v1328 = vadd.f32 0.0, %v1327
        %v1329 = vpop.f32.mrb[0].mxu0
        %1330 = vmatprep.mubr.f32.mxu0 0.0
        %1331 = vmatmul.mubr.f32.gmra.mrb[0].mxu0 %v960
        %v1332 = vpop.f32.mrb[0].mxu0
        %v1333 = vadd.f32 0.0, %v1332
        %v1334 = vpop.f32.mrb[0].mxu0
        %1335 = vmatprep.mubr.f32.mxu0 0.0
        %1336 = vmatmul.mubr.f32.gmra.mrb[0].mxu0 %v961
        %v1337 = vpop.f32.mrb[0].mxu0
        %v1338 = vadd.f32 0.0, %v1337
        %v1339 = vpop.f32.mrb[0].mxu0
        %1340 = vdwg.mxu0
        %v1341 = vld [vmem:[%s2] sm:$0xff]
        %v1342 = vld [vmem:[%s2 + $0x8] sm:$0xff]
        %v1343 = vld [vmem:[%s2 + $0x10] sm:$0xff]
        %v1344 = vld [vmem:[%s2 + $0x18] sm:$0xff]
        %v1345 = vld [vmem:[%s2 + $0x20] sm:$0xff]
        %v1346 = vld [vmem:[%s2 + $0x28] sm:$0xff]
        %v1347 = vld [vmem:[%s2 + $0x30] sm:$0xff]
        %v1348 = vld [vmem:[%s2 + $0x38] sm:$0xff]
        %vm1349 = vcmask 64512
        %v1351 = vsel %vm1349, %v1053, 0
        %v1354 = vsel %vm1349, %v1058, 0
        %v1357 = vsel %vm1349, %v1063, 0
        %v1360 = vsel %vm1349, %v1068, 0
        %v1363 = vsel %vm1349, %v1073, 0
        %v1366 = vsel %vm1349, %v1078, 0
        %v1369 = vsel %vm1349, %v1083, 0
        %v1372 = vsel %vm1349, %v1088, 0
        %v1375 = vsel %vm1349, %v1182, 0
        %v1378 = vsel %vm1349, %v1187, 0
        %v1381 = vsel %vm1349, %v1192, 0
        %v1384 = vsel %vm1349, %v1197, 0
        %v1387 = vsel %vm1349, %v1202, 0
        %v1390 = vsel %vm1349, %v1207, 0
        %v1393 = vsel %vm1349, %v1212, 0
        %v1396 = vsel %vm1349, %v1217, 0
        %1398 = vmatprep.subr.mxu0 0.0
        %1399 = vmatpush1.xpose.msra.mxu0 %v1375
        %1400 = vmatprep.subr.mxu0 0.0
        %1401 = vmatpush1.xpose.msra.mxu0 %v1378
        %1402 = vmatprep.subr.mxu0 0.0
        %1403 = vmatpush1.xpose.msra.mxu0 %v1381
        %1404 = vmatprep.subr.mxu0 0.0
        %1405 = vmatpush1.xpose.msra.mxu0 %v1384
        %1406 = vmatprep.subr.mxu0 0.0
        %1407 = vmatpush1.xpose.msra.mxu0 %v1387
        %1408 = vmatprep.subr.mxu0 0.0
        %1409 = vmatpush1.xpose.msra.mxu0 %v1390
        %1410 = vmatprep.subr.mxu0 0.0
        %1411 = vmatpush1.xpose.msra.mxu0 %v1393
        %1412 = vmatprep.subr.mxu0 0.0
        %1413 = vmatpush1.xpose.msra.mxu0 %v1396
        %1414 = vmatprep.subr.mxu0 0.0
        %1415 = vmatpush1.xpose.msra.mxu0 0.0
        %1416 = vmatprep.subr.mxu0 0.0
        %1417 = vmatpush1.xpose.msra.mxu0 0.0
        %1418 = vmatprep.subr.mxu0 0.0
        %1419 = vmatpush1.xpose.msra.mxu0 0.0
        %1420 = vmatprep.subr.mxu0 0.0
        %1421 = vmatpush1.xpose.msra.mxu0 0.0
        %1422 = vmatprep.subr.mxu0 0.0
        %1423 = vmatpush1.xpose.msra.mxu0 0.0
        %1424 = vmatprep.subr.mxu0 0.0
        %1425 = vmatpush1.xpose.msra.mxu0 0.0
        %1426 = vmatprep.subr.mxu0 0.0
        %1427 = vmatpush1.xpose.msra.mxu0 0.0
        %1428 = vmatprep.subr.mxu0 0.0
        %1429 = vmatpush1.xpose.msra.mxu0 0.0
        %1430 = vmatprep.subr.mxu0 0.0
        %1431 = vmatpush1.xpose.msra.mxu0 0.0
        %1432 = vmatprep.subr.mxu0 0.0
        %1433 = vmatpush1.xpose.msra.mxu0 0.0
        %1434 = vmatprep.subr.mxu0 0.0
        %1435 = vmatpush1.xpose.msra.mxu0 0.0
        %1436 = vmatprep.subr.mxu0 0.0
        %1437 = vmatpush1.xpose.msra.mxu0 0.0
        %1438 = vmatprep.subr.mxu0 0.0
        %1439 = vmatpush1.xpose.msra.mxu0 0.0
        %1440 = vmatprep.subr.mxu0 0.0
        %1441 = vmatpush1.xpose.msra.mxu0 0.0
        %1442 = vmatprep.subr.mxu0 0.0
        %1443 = vmatpush1.xpose.msra.mxu0 0.0
        %1444 = vmatprep.subr.mxu0 0.0
        %1445 = vmatpush1.xpose.msra.mxu0 0.0
        %1446 = vmatprep.subr.mxu0 0.0
        %1447 = vmatpush1.xpose.msra.mxu0 0.0
        %1448 = vmatprep.subr.mxu0 0.0
        %1449 = vmatpush1.xpose.msra.mxu0 0.0
        %1450 = vmatprep.subr.mxu0 0.0
        %1451 = vmatpush1.xpose.msra.mxu0 0.0
        %1452 = vmatprep.subr.mxu0 0.0
        %1453 = vmatpush1.xpose.msra.mxu0 0.0
        %1454 = vmatprep.subr.mxu0 0.0
        %1455 = vmatpush1.xpose.msra.mxu0 0.0
        %1456 = vmatprep.subr.mxu0 0.0
        %1457 = vmatpush1.xpose.msra.mxu0 0.0
        %1458 = vmatprep.subr.mxu0 0.0
        %1459 = vmatpush1.xpose.msra.mxu0 0.0
        %1460 = vmatprep.subr.mxu0 0.0
        %1461 = vmatpush1.xpose.msra.mxu0 0.0
        %1462 = vmatprep.mubr.f32.mxu0 0.0
        %1463 = vmatmul.mubr.f32.gmra.mrb[0].mxu0 %v1351
        %v1464 = vpop.f32.mrb[0].mxu0
        %v1465 = vadd.f32 %v1341, %v1464
        %v1466 = vpop.f32.mrb[0].mxu0
        %1467 = vmatprep.mubr.f32.mxu0 0.0
        %1468 = vmatmul.mubr.f32.gmra.mrb[0].mxu0 %v1354
        %v1469 = vpop.f32.mrb[0].mxu0
        %v1470 = vadd.f32 %v1342, %v1469
        %v1471 = vpop.f32.mrb[0].mxu0
        %1472 = vmatprep.mubr.f32.mxu0 0.0
        %1473 = vmatmul.mubr.f32.gmra.mrb[0].mxu0 %v1357
        %v1474 = vpop.f32.mrb[0].mxu0
        %v1475 = vadd.f32 %v1343, %v1474
        %v1476 = vpop.f32.mrb[0].mxu0
        %1477 = vmatprep.mubr.f32.mxu0 0.0
        %1478 = vmatmul.mubr.f32.gmra.mrb[0].mxu0 %v1360
        %v1479 = vpop.f32.mrb[0].mxu0
        %v1480 = vadd.f32 %v1344, %v1479
        %v1481 = vpop.f32.mrb[0].mxu0
        %1482 = vmatprep.mubr.f32.mxu0 0.0
        %1483 = vmatmul.mubr.f32.gmra.mrb[0].mxu0 %v1363
        %v1484 = vpop.f32.mrb[0].mxu0
        %v1485 = vadd.f32 %v1345, %v1484
        %v1486 = vpop.f32.mrb[0].mxu0
        %1487 = vmatprep.mubr.f32.mxu0 0.0
        %1488 = vmatmul.mubr.f32.gmra.mrb[0].mxu0 %v1366
        %v1489 = vpop.f32.mrb[0].mxu0
        %v1490 = vadd.f32 %v1346, %v1489
        %v1491 = vpop.f32.mrb[0].mxu0
        %1492 = vmatprep.mubr.f32.mxu0 0.0
        %1493 = vmatmul.mubr.f32.gmra.mrb[0].mxu0 %v1369
        %v1494 = vpop.f32.mrb[0].mxu0
        %v1495 = vadd.f32 %v1347, %v1494
        %v1496 = vpop.f32.mrb[0].mxu0
        %1497 = vmatprep.mubr.f32.mxu0 0.0
        %1498 = vmatmul.mubr.f32.gmra.mrb[0].mxu0 %v1372
        %v1499 = vpop.f32.mrb[0].mxu0
        %v1500 = vadd.f32 %v1348, %v1499
        %v1501 = vpop.f32.mrb[0].mxu0
        %1502 = vdwg.mxu0
        %v1503 = vsel %vm940, %v1465, -inf
        %1504 = vmax.xlane.f32.xlu0 %v1503
        %v1505 = vpop.xlane.xlu0 %1504
        %v1506 = vsel %vm940, %v1470, -inf
        %1507 = vmax.xlane.f32.xlu0 %v1506
        %v1508 = vpop.xlane.xlu0 %1507
        %v1509 = vsel %vm940, %v1475, -inf
        %1510 = vmax.xlane.f32.xlu0 %v1509
        %v1511 = vpop.xlane.xlu0 %1510
        %v1512 = vsel %vm940, %v1480, -inf
        %1513 = vmax.xlane.f32.xlu0 %v1512
        %v1514 = vpop.xlane.xlu0 %1513
        %v1515 = vsel %vm940, %v1485, -inf
        %1516 = vmax.xlane.f32.xlu0 %v1515
        %v1517 = vpop.xlane.xlu0 %1516
        %v1518 = vsel %vm940, %v1490, -inf
        %1519 = vmax.xlane.f32.xlu0 %v1518
        %v1520 = vpop.xlane.xlu0 %1519
        %v1521 = vsel %vm940, %v1495, -inf
        %1522 = vmax.xlane.f32.xlu0 %v1521
        %v1523 = vpop.xlane.xlu0 %1522
        %v1524 = vsel %vm940, %v1500, -inf
        %1525 = vmax.xlane.f32.xlu0 %v1524
        %v1526 = vpop.xlane.xlu0 %1525
        %v1527 = vsub.f32 %v1465, %v1505
        %v1528 = vsub.f32 %v1470, %v1508
        %v1529 = vsub.f32 %v1475, %v1511
        %v1530 = vsub.f32 %v1480, %v1514
        %v1531 = vsub.f32 %v1485, %v1517
        %v1532 = vsub.f32 %v1490, %v1520
        %v1533 = vsub.f32 %v1495, %v1523
        %v1534 = vsub.f32 %v1500, %v1526
        %v1535 = vmul.f32 %v1527, 1.442695
        %v1536 = vpow.pop %v1535
        %v1537 = vmul.f32 %v1528, 1.442695
        %v1538 = vpow.pop %v1537
        %v1539 = vmul.f32 %v1529, 1.442695
        %v1540 = vpow.pop %v1539
        %v1541 = vmul.f32 %v1530, 1.442695
        %v1542 = vpow.pop %v1541
        %v1543 = vmul.f32 %v1531, 1.442695
        %v1544 = vpow.pop %v1543
        %v1545 = vmul.f32 %v1532, 1.442695
        %v1546 = vpow.pop %v1545
        %v1547 = vmul.f32 %v1533, 1.442695
        %v1548 = vpow.pop %v1547
        %v1549 = vmul.f32 %v1534, 1.442695
        %v1550 = vpow.pop %v1549
        %v1551 = vsel %vm940, %v1536, 0.0
        %1552 = vadd.xlane.f32.xlu0 %v1551
        %v1553 = vpop.xlane.xlu0 %1552
        %v1554 = vsel %vm940, %v1538, 0.0
        %1555 = vadd.xlane.f32.xlu0 %v1554
        %v1556 = vpop.xlane.xlu0 %1555
        %v1557 = vsel %vm940, %v1540, 0.0
        %1558 = vadd.xlane.f32.xlu0 %v1557
        %v1559 = vpop.xlane.xlu0 %1558
        %v1560 = vsel %vm940, %v1542, 0.0
        %1561 = vadd.xlane.f32.xlu0 %v1560
        %v1562 = vpop.xlane.xlu0 %1561
        %v1563 = vsel %vm940, %v1544, 0.0
        %1564 = vadd.xlane.f32.xlu0 %v1563
        %v1565 = vpop.xlane.xlu0 %1564
        %v1566 = vsel %vm940, %v1546, 0.0
        %1567 = vadd.xlane.f32.xlu0 %v1566
        %v1568 = vpop.xlane.xlu0 %1567
        %v1569 = vsel %vm940, %v1548, 0.0
        %1570 = vadd.xlane.f32.xlu0 %v1569
        %v1571 = vpop.xlane.xlu0 %1570
        %v1572 = vsel %vm940, %v1550, 0.0
        %1573 = vadd.xlane.f32.xlu0 %v1572
        %v1574 = vpop.xlane.xlu0 %1573
        %v1576 = vsel %vm940, %v1536, 0
        %v1579 = vsel %vm940, %v1538, 0
        %v1582 = vsel %vm940, %v1540, 0
        %v1585 = vsel %vm940, %v1542, 0
        %v1588 = vsel %vm940, %v1544, 0
        %v1591 = vsel %vm940, %v1546, 0
        %v1594 = vsel %vm940, %v1548, 0
        %v1597 = vsel %vm940, %v1550, 0
        %1599 = vmatprep.subr.mxu0 0.0
        %1600 = vmatpush1.msra.mxu0 %v1303
        %1601 = vmatprep.subr.mxu0 0.0
        %1602 = vmatpush1.msra.mxu0 %v1308
        %1603 = vmatprep.subr.mxu0 0.0
        %1604 = vmatpush1.msra.mxu0 %v1313
        %1605 = vmatprep.subr.mxu0 0.0
        %1606 = vmatpush1.msra.mxu0 %v1318
        %1607 = vmatprep.subr.mxu0 0.0
        %1608 = vmatpush1.msra.mxu0 %v1323
        %1609 = vmatprep.subr.mxu0 0.0
        %1610 = vmatpush1.msra.mxu0 %v1328
        %1611 = vmatprep.subr.mxu0 0.0
        %1612 = vmatpush1.msra.mxu0 %v1333
        %1613 = vmatprep.subr.mxu0 0.0
        %1614 = vmatpush1.msra.mxu0 %v1338
        %1615 = vmatprep.subr.mxu0 0.0
        %1616 = vmatpush1.msra.mxu0 0.0
        %1617 = vmatprep.subr.mxu0 0.0
        %1618 = vmatpush1.msra.mxu0 0.0
        %1619 = vmatprep.subr.mxu0 0.0
        %1620 = vmatpush1.msra.mxu0 0.0
        %1621 = vmatprep.subr.mxu0 0.0
        %1622 = vmatpush1.msra.mxu0 0.0
        %1623 = vmatprep.subr.mxu0 0.0
        %1624 = vmatpush1.msra.mxu0 0.0
        %1625 = vmatprep.subr.mxu0 0.0
        %1626 = vmatpush1.msra.mxu0 0.0
        %1627 = vmatprep.subr.mxu0 0.0
        %1628 = vmatpush1.msra.mxu0 0.0
        %1629 = vmatprep.subr.mxu0 0.0
        %1630 = vmatpush1.msra.mxu0 0.0
        %1631 = vmatprep.subr.mxu0 0.0
        %1632 = vmatpush1.msra.mxu0 0.0
        %1633 = vmatprep.subr.mxu0 0.0
        %1634 = vmatpush1.msra.mxu0 0.0
        %1635 = vmatprep.subr.mxu0 0.0
        %1636 = vmatpush1.msra.mxu0 0.0
        %1637 = vmatprep.subr.mxu0 0.0
        %1638 = vmatpush1.msra.mxu0 0.0
        %1639 = vmatprep.subr.mxu0 0.0
        %1640 = vmatpush1.msra.mxu0 0.0
        %1641 = vmatprep.subr.mxu0 0.0
        %1642 = vmatpush1.msra.mxu0 0.0
        %1643 = vmatprep.subr.mxu0 0.0
        %1644 = vmatpush1.msra.mxu0 0.0
        %1645 = vmatprep.subr.mxu0 0.0
        %1646 = vmatpush1.msra.mxu0 0.0
        %1647 = vmatprep.subr.mxu0 0.0
        %1648 = vmatpush1.msra.mxu0 0.0
        %1649 = vmatprep.subr.mxu0 0.0
        %1650 = vmatpush1.msra.mxu0 0.0
        %1651 = vmatprep.subr.mxu0 0.0
        %1652 = vmatpush1.msra.mxu0 0.0
        %1653 = vmatprep.subr.mxu0 0.0
        %1654 = vmatpush1.msra.mxu0 0.0
        %1655 = vmatprep.subr.mxu0 0.0
        %1656 = vmatpush1.msra.mxu0 0.0
        %1657 = vmatprep.subr.mxu0 0.0
        %1658 = vmatpush1.msra.mxu0 0.0
        %1659 = vmatprep.subr.mxu0 0.0
        %1660 = vmatpush1.msra.mxu0 0.0
        %1661 = vmatprep.subr.mxu0 0.0
        %1662 = vmatpush1.msra.mxu0 0.0
        %1663 = vmatprep.mubr.f32.mxu0 0.0
        %1664 = vmatmul.mubr.f32.gmra.mrb[0].mxu0 %v1576
        %v1665 = vpop.f32.mrb[0].mxu0
        %v1666 = vadd.f32 0.0, %v1665
        %v1667 = vpop.f32.mrb[0].mxu0
        %1668 = vmatprep.mubr.f32.mxu0 0.0
        %1669 = vmatmul.mubr.f32.gmra.mrb[0].mxu0 %v1579
        %v1670 = vpop.f32.mrb[0].mxu0
        %v1671 = vadd.f32 0.0, %v1670
        %v1672 = vpop.f32.mrb[0].mxu0
        %1673 = vmatprep.mubr.f32.mxu0 0.0
        %1674 = vmatmul.mubr.f32.gmra.mrb[0].mxu0 %v1582
        %v1675 = vpop.f32.mrb[0].mxu0
        %v1676 = vadd.f32 0.0, %v1675
        %v1677 = vpop.f32.mrb[0].mxu0
        %1678 = vmatprep.mubr.f32.mxu0 0.0
        %1679 = vmatmul.mubr.f32.gmra.mrb[0].mxu0 %v1585
        %v1680 = vpop.f32.mrb[0].mxu0
        %v1681 = vadd.f32 0.0, %v1680
        %v1682 = vpop.f32.mrb[0].mxu0
        %1683 = vmatprep.mubr.f32.mxu0 0.0
        %1684 = vmatmul.mubr.f32.gmra.mrb[0].mxu0 %v1588
        %v1685 = vpop.f32.mrb[0].mxu0
        %v1686 = vadd.f32 0.0, %v1685
        %v1687 = vpop.f32.mrb[0].mxu0
        %1688 = vmatprep.mubr.f32.mxu0 0.0
        %1689 = vmatmul.mubr.f32.gmra.mrb[0].mxu0 %v1591
        %v1690 = vpop.f32.mrb[0].mxu0
        %v1691 = vadd.f32 0.0, %v1690
        %v1692 = vpop.f32.mrb[0].mxu0
        %1693 = vmatprep.mubr.f32.mxu0 0.0
        %1694 = vmatmul.mubr.f32.gmra.mrb[0].mxu0 %v1594
        %v1695 = vpop.f32.mrb[0].mxu0
        %v1696 = vadd.f32 0.0, %v1695
        %v1697 = vpop.f32.mrb[0].mxu0
        %1698 = vmatprep.mubr.f32.mxu0 0.0
        %1699 = vmatmul.mubr.f32.gmra.mrb[0].mxu0 %v1597
        %v1700 = vpop.f32.mrb[0].mxu0
        %v1701 = vadd.f32 0.0, %v1700
        %v1702 = vpop.f32.mrb[0].mxu0
        %1703 = vdwg.mxu0
        %v1704 = vrcp.pop %v1553
        %v1705 = vrcp.pop %v1556
        %v1706 = vrcp.pop %v1559
        %v1707 = vrcp.pop %v1562
        %v1708 = vrcp.pop %v1565
        %v1709 = vrcp.pop %v1568
        %v1710 = vrcp.pop %v1571
        %v1711 = vrcp.pop %v1574
        %v1712 = vmul.f32 %v1666, %v1704
        %v1713 = vmul.f32 %v1671, %v1705
        %v1714 = vmul.f32 %v1676, %v1706
        %v1715 = vmul.f32 %v1681, %v1707
        %v1716 = vmul.f32 %v1686, %v1708
        %v1717 = vmul.f32 %v1691, %v1709
        %v1718 = vmul.f32 %v1696, %v1710
        %v1719 = vmul.f32 %v1701, %v1711
        %v1720 = vadd.f32 %v1712, %v1714
        %v1721 = vadd.f32 %v1713, %v1715
        %v1722 = vadd.f32 %v1720, %v1716
        %v1723 = vadd.f32 %v1721, %v1717
        %v1724 = vadd.f32 %v1722, %v1718
        %v1725 = vadd.f32 %v1723, %v1719
        %v1726 = vadd.f32 %v870, %v1724
        %v1727 = vadd.f32 %v871, %v1725
        %v1728 = vld [vmem:[%s838] sm:$0x1]
        %v1730 = vlaneseq
        %v1731 = vshrl.u32 %v1730, 7
        %v1732 = vsub.s32 0, %v1731
        %v1733 = vrot.slane %v1728, %v1732
        %v1735 = vadd.f32 %v1726, %v1733
        %v1736 = vadd.f32 %v1727, %v1733
        %v1737 = vld [vmem:[%s841] sm:$0x1]
        %v1738 = vld [vmem:[%s844] sm:$0x1]
        %v1739 = vsel %vm874, %v1735, 0.0
        %1740 = vadd.xlane.f32.xlu0 %v1739
        %v1741 = vpop.xlane.xlu0 %1740
        %v1742 = vsel %vm874, %v1736, 0.0
        %1743 = vadd.xlane.f32.xlu0 %v1742
        %v1744 = vpop.xlane.xlu0 %1743
        %v1745 = vmul.f32 %v1741, %v881
        %v1746 = vmul.f32 %v1744, %v881
        %v1747 = vsub.f32 %v1735, %v1745
        %v1748 = vsub.f32 %v1736, %v1746
        %v1749 = vmul.f32 %v1747, %v1747
        %v1750 = vmul.f32 %v1748, %v1748
        %v1751 = vsel %vm874, %v1749, 0.0
        %1752 = vadd.xlane.f32.xlu0 %v1751
        %v1753 = vpop.xlane.xlu0 %1752
        %v1754 = vsel %vm874, %v1750, 0.0
        %1755 = vadd.xlane.f32.xlu0 %v1754
        %v1756 = vpop.xlane.xlu0 %1755
        %v1757 = vmul.f32 %v1753, %v881
        %v1758 = vmul.f32 %v1756, %v881
        %v1759 = vadd.f32 %v1757, 1e-05
        %v1760 = vadd.f32 %v1758, 1e-05
        %v1761 = vrsqrt.pop %v1759
        %v1762 = vrsqrt.pop %v1760
        %v1763 = vmul.f32 %v1747, %v1761
        %v1764 = vmul.f32 %v1748, %v1762
        %v1766 = vlaneseq
        %v1767 = vshrl.u32 %v1766, 7
        %v1768 = vsub.s32 0, %v1767
        %v1769 = vrot.slane %v1737, %v1768
        %v1771 = vmul.f32 %v1763, %v1769
        %v1772 = vmul.f32 %v1764, %v1769
        %v1774 = vlaneseq
        %v1775 = vshrl.u32 %v1774, 7
        %v1776 = vsub.s32 0, %v1775
        %v1777 = vrot.slane %v1738, %v1776
        %v1779 = vadd.f32 %v1771, %v1777
        %v1780 = vadd.f32 %v1772, %v1777
        %v1781 = vld [vmem:[%s849] sm:$0xff]
        %v1782 = vld [vmem:[%s849 + $0x8] sm:$0xff]
        %v1783 = vld [vmem:[%s849 + $0x10] sm:$0xff]
        %v1784 = vld [vmem:[%s849 + $0x18] sm:$0xff]
        %v1785 = vld [vmem:[%s852] sm:$0x1]
        %v1787 = vlaneseq
        %v1788 = vshrl.u32 %v1787, 7
        %v1789 = vsub.s32 0, %v1788
        %v1790 = vrot.slane %v1785, %v1789
        %v1793 = vsel %vm874, %v1779, 0
        %v1796 = vsel %vm874, %v1780, 0
        %1798 = vmatprep.subr.mxu0 0.0
        %1799 = vmatpush1.msra.mxu0 %v1781
        %1800 = vmatprep.subr.mxu0 0.0
        %1801 = vmatpush1.msra.mxu0 %v1782
        %1802 = vmatprep.subr.mxu0 0.0
        %1803 = vmatpush1.msra.mxu0 %v1783
        %1804 = vmatprep.subr.mxu0 0.0
        %1805 = vmatpush1.msra.mxu0 %v1784
        %1806 = vmatprep.subr.mxu0 0.0
        %1807 = vmatpush1.msra.mxu0 0.0
        %1808 = vmatprep.subr.mxu0 0.0
        %1809 = vmatpush1.msra.mxu0 0.0
        %1810 = vmatprep.subr.mxu0 0.0
        %1811 = vmatpush1.msra.mxu0 0.0
        %1812 = vmatprep.subr.mxu0 0.0
        %1813 = vmatpush1.msra.mxu0 0.0
        %1814 = vmatprep.subr.mxu0 0.0
        %1815 = vmatpush1.msra.mxu0 0.0
        %1816 = vmatprep.subr.mxu0 0.0
        %1817 = vmatpush1.msra.mxu0 0.0
        %1818 = vmatprep.subr.mxu0 0.0
        %1819 = vmatpush1.msra.mxu0 0.0
        %1820 = vmatprep.subr.mxu0 0.0
        %1821 = vmatpush1.msra.mxu0 0.0
        %1822 = vmatprep.subr.mxu0 0.0
        %1823 = vmatpush1.msra.mxu0 0.0
        %1824 = vmatprep.subr.mxu0 0.0
        %1825 = vmatpush1.msra.mxu0 0.0
        %1826 = vmatprep.subr.mxu0 0.0
        %1827 = vmatpush1.msra.mxu0 0.0
        %1828 = vmatprep.subr.mxu0 0.0
        %1829 = vmatpush1.msra.mxu0 0.0
        %1830 = vmatprep.subr.mxu0 0.0
        %1831 = vmatpush1.msra.mxu0 0.0
        %1832 = vmatprep.subr.mxu0 0.0
        %1833 = vmatpush1.msra.mxu0 0.0
        %1834 = vmatprep.subr.mxu0 0.0
        %1835 = vmatpush1.msra.mxu0 0.0
        %1836 = vmatprep.subr.mxu0 0.0
        %1837 = vmatpush1.msra.mxu0 0.0
        %1838 = vmatprep.subr.mxu0 0.0
        %1839 = vmatpush1.msra.mxu0 0.0
        %1840 = vmatprep.subr.mxu0 0.0
        %1841 = vmatpush1.msra.mxu0 0.0
        %1842 = vmatprep.subr.mxu0 0.0
        %1843 = vmatpush1.msra.mxu0 0.0
        %1844 = vmatprep.subr.mxu0 0.0
        %1845 = vmatpush1.msra.mxu0 0.0
        %1846 = vmatprep.subr.mxu0 0.0
        %1847 = vmatpush1.msra.mxu0 0.0
        %1848 = vmatprep.subr.mxu0 0.0
        %1849 = vmatpush1.msra.mxu0 0.0
        %1850 = vmatprep.subr.mxu0 0.0
        %1851 = vmatpush1.msra.mxu0 0.0
        %1852 = vmatprep.subr.mxu0 0.0
        %1853 = vmatpush1.msra.mxu0 0.0
        %1854 = vmatprep.subr.mxu0 0.0
        %1855 = vmatpush1.msra.mxu0 0.0
        %1856 = vmatprep.subr.mxu0 0.0
        %1857 = vmatpush1.msra.mxu0 0.0
        %1858 = vmatprep.subr.mxu0 0.0
        %1859 = vmatpush1.msra.mxu0 0.0
        %1860 = vmatprep.subr.mxu0 0.0
        %1861 = vmatpush1.msra.mxu0 0.0
        %1862 = vmatprep.mubr.f32.mxu0 0.0
        %1863 = vmatmul.mubr.f32.gmra.mrb[0].mxu0 %v1793
        %v1864 = vpop.f32.mrb[0].mxu0
        %v1865 = vadd.f32 %v1790, %v1864
        %v1866 = vpop.f32.mrb[0].mxu0
        %1867 = vmatprep.mubr.f32.mxu0 0.0
        %1868 = vmatmul.mubr.f32.gmra.mrb[0].mxu0 %v1796
        %v1869 = vpop.f32.mrb[0].mxu0
        %v1870 = vadd.f32 %v1790, %v1869
        %v1871 = vpop.f32.mrb[0].mxu0
        %1872 = vdwg.mxu0
        %v1873 = vmul.f32 %v1865, 0.5
        %v1874 = vmul.f32 %v1870, 0.5
        %v1875 = vmul.f32 %v1865, 0.044715
        %v1876 = vmul.f32 %v1870, 0.044715
        %v1877 = vmul.f32 %v1875, %v1865
        %v1878 = vmul.f32 %v1876, %v1870
        %v1879 = vmul.f32 %v1877, %v1865
        %v1880 = vmul.f32 %v1878, %v1870
        %v1881 = vadd.f32 %v1865, %v1879
        %v1882 = vadd.f32 %v1870, %v1880
        %v1883 = vmul.f32 %v1881, 0.7978845
        %v1884 = vmul.f32 %v1882, 0.7978845
        %v1885 = vtanh.pop %v1883
        %v1886 = vtanh.pop %v1884
        %v1887 = vadd.f32 %v1885, 1.0
        %v1888 = vadd.f32 %v1886, 1.0
        %v1889 = vmul.f32 %v1873, %v1887
        %v1890 = vmul.f32 %v1874, %v1888
        %v1891 = vld [vmem:[%s857] sm:$0xff]
        %v1892 = vld [vmem:[%s857 + $0x8] sm:$0xff]
        %v1893 = vld [vmem:[%s857 + $0x10] sm:$0xff]
        %v1894 = vld [vmem:[%s857 + $0x18] sm:$0xff]
        %v1895 = vld [vmem:[%s857 + $0x20] sm:$0xff]
        %v1896 = vld [vmem:[%s857 + $0x28] sm:$0xff]
        %v1897 = vld [vmem:[%s857 + $0x30] sm:$0xff]
        %v1898 = vld [vmem:[%s857 + $0x38] sm:$0xff]
        %v1899 = vld [vmem:[%s857 + $0x40] sm:$0xff]
        %v1900 = vld [vmem:[%s857 + $0x48] sm:$0xff]
        %v1901 = vld [vmem:[%s857 + $0x50] sm:$0xff]
        %v1902 = vld [vmem:[%s857 + $0x58] sm:$0xff]
        %v1903 = vld [vmem:[%s857 + $0x60] sm:$0xff]
        %v1904 = vld [vmem:[%s857 + $0x68] sm:$0xff]
        %v1905 = vld [vmem:[%s857 + $0x70] sm:$0xff]
        %v1906 = vld [vmem:[%s857 + $0x78] sm:$0xff]
        %1907 = vmatprep.subr.mxu0 0.0
        %1908 = vmatpush1.msra.mxu0 %v1891
        %1909 = vmatprep.subr.mxu0 0.0
        %1910 = vmatpush1.msra.mxu0 %v1892
        %1911 = vmatprep.subr.mxu0 0.0
        %1912 = vmatpush1.msra.mxu0 %v1893
        %1913 = vmatprep.subr.mxu0 0.0
        %1914 = vmatpush1.msra.mxu0 %v1894
        %1915 = vmatprep.subr.mxu0 0.0
        %1916 = vmatpush1.msra.mxu0 %v1895
        %1917 = vmatprep.subr.mxu0 0.0
        %1918 = vmatpush1.msra.mxu0 %v1896
        %1919 = vmatprep.subr.mxu0 0.0
        %1920 = vmatpush1.msra.mxu0 %v1897
        %1921 = vmatprep.subr.mxu0 0.0
        %1922 = vmatpush1.msra.mxu0 %v1898
        %1923 = vmatprep.subr.mxu0 0.0
        %1924 = vmatpush1.msra.mxu0 %v1899
        %1925 = vmatprep.subr.mxu0 0.0
        %1926 = vmatpush1.msra.mxu0 %v1900
        %1927 = vmatprep.subr.mxu0 0.0
        %1928 = vmatpush1.msra.mxu0 %v1901
        %1929 = vmatprep.subr.mxu0 0.0
        %1930 = vmatpush1.msra.mxu0 %v1902
        %1931 = vmatprep.subr.mxu0 0.0
        %1932 = vmatpush1.msra.mxu0 %v1903
        %1933 = vmatprep.subr.mxu0 0.0
        %1934 = vmatpush1.msra.mxu0 %v1904
        %1935 = vmatprep.subr.mxu0 0.0
        %1936 = vmatpush1.msra.mxu0 %v1905
        %1937 = vmatprep.subr.mxu0 0.0
        %1938 = vmatpush1.msra.mxu0 %v1906
        %1939 = vmatprep.subr.mxu0 0.0
        %1940 = vmatpush1.msra.mxu0 0.0
        %1941 = vmatprep.subr.mxu0 0.0
        %1942 = vmatpush1.msra.mxu0 0.0
        %1943 = vmatprep.subr.mxu0 0.0
        %1944 = vmatpush1.msra.mxu0 0.0
        %1945 = vmatprep.subr.mxu0 0.0
        %1946 = vmatpush1.msra.mxu0 0.0
        %1947 = vmatprep.subr.mxu0 0.0
        %1948 = vmatpush1.msra.mxu0 0.0
        %1949 = vmatprep.subr.mxu0 0.0
        %1950 = vmatpush1.msra.mxu0 0.0
        %1951 = vmatprep.subr.mxu0 0.0
        %1952 = vmatpush1.msra.mxu0 0.0
        %1953 = vmatprep.subr.mxu0 0.0
        %1954 = vmatpush1.msra.mxu0 0.0
        %1955 = vmatprep.subr.mxu0 0.0
        %1956 = vmatpush1.msra.mxu0 0.0
        %1957 = vmatprep.subr.mxu0 0.0
        %1958 = vmatpush1.msra.mxu0 0.0
        %1959 = vmatprep.subr.mxu0 0.0
        %1960 = vmatpush1.msra.mxu0 0.0
        %1961 = vmatprep.subr.mxu0 0.0
        %1962 = vmatpush1.msra.mxu0 0.0
        %1963 = vmatprep.subr.mxu0 0.0
        %1964 = vmatpush1.msra.mxu0 0.0
        %1965 = vmatprep.subr.mxu0 0.0
        %1966 = vmatpush1.msra.mxu0 0.0
        %1967 = vmatprep.subr.mxu0 0.0
        %1968 = vmatpush1.msra.mxu0 0.0
        %1969 = vmatprep.subr.mxu0 0.0
        %1970 = vmatpush1.msra.mxu0 0.0
        %1971 = vmatprep.mubr.f32.mxu0 0.0
        %1972 = vmatmul.mubr.f32.gmra.mrb[0].mxu0 %v1889
        %v1973 = vpop.f32.mrb[0].mxu0
        %v1974 = vadd.f32 0.0, %v1973
        %v1975 = vpop.f32.mrb[0].mxu0
        %1976 = vmatprep.mubr.f32.mxu0 0.0
        %1977 = vmatmul.mubr.f32.gmra.mrb[0].mxu0 %v1890
        %v1978 = vpop.f32.mrb[0].mxu0
        %v1979 = vadd.f32 0.0, %v1978
        %v1980 = vpop.f32.mrb[0].mxu0
        %1981 = vdwg.mxu0
        %v1982 = vadd.f32 %v1735, %v1974
        %v1983 = vadd.f32 %v1736, %v1979
        %v1984 = vld [vmem:[%s860] sm:$0x1]
        %v1986 = vlaneseq
        %v1987 = vshrl.u32 %v1986, 7
        %v1988 = vsub.s32 0, %v1987
        %v1989 = vrot.slane %v1984, %v1988
        %v1991 = vadd.f32 %v1982, %v1989
        %v1992 = vadd.f32 %v1983, %v1989
        %1993 = vst.msk [vmem:[#allocation2] sm:$0xff] %vm874, %v1991
        %1994 = vst.msk [vmem:[#allocation2 + $0x8] sm:$0xff] %vm874, %v1992
        %p1995 = scmp.eq.s32.totalorder %s33, 1
        // Predicated region
        $region109: #{tpu_custom_call.1} parent=103 // pred_check
          %p1996 = pneg %p1995
        $region110: #{tpu_custom_call.1} parent=103 // pred_check_branch
          %1998 = sbr.rel (%p1996) target = $region112
        $region111: #{tpu_custom_call.1} parent=103 // pred_region
          %v1999 = vld [vmem:[%s3] sm:$0x1]
          %v2000 = vld [vmem:[%s4] sm:$0x1]
          %v2001 = vsel %vm874, %v1991, 0.0
          %2002 = vadd.xlane.f32.xlu0 %v2001
          %v2003 = vpop.xlane.xlu0 %2002
          %v2004 = vsel %vm874, %v1992, 0.0
          %2005 = vadd.xlane.f32.xlu0 %v2004
          %v2006 = vpop.xlane.xlu0 %2005
          %v2007 = vmul.f32 %v2003, %v881
          %v2008 = vmul.f32 %v2006, %v881
          %v2009 = vsub.f32 %v1991, %v2007
          %v2010 = vsub.f32 %v1992, %v2008
          %v2011 = vmul.f32 %v2009, %v2009
          %v2012 = vmul.f32 %v2010, %v2010
          %v2013 = vsel %vm874, %v2011, 0.0
          %2014 = vadd.xlane.f32.xlu0 %v2013
          %v2015 = vpop.xlane.xlu0 %2014
          %v2016 = vsel %vm874, %v2012, 0.0
          %2017 = vadd.xlane.f32.xlu0 %v2016
          %v2018 = vpop.xlane.xlu0 %2017
          %v2019 = vmul.f32 %v2015, %v881
          %v2020 = vmul.f32 %v2018, %v881
          %v2021 = vadd.f32 %v2019, 1e-05
          %v2022 = vadd.f32 %v2020, 1e-05
          %v2023 = vrsqrt.pop %v2021
          %v2024 = vrsqrt.pop %v2022
          %v2025 = vmul.f32 %v2009, %v2023
          %v2026 = vmul.f32 %v2010, %v2024
          %v2028 = vlaneseq
          %v2029 = vshrl.u32 %v2028, 7
          %v2030 = vsub.s32 0, %v2029
          %v2031 = vrot.slane %v1999, %v2030
          %v2033 = vmul.f32 %v2025, %v2031
          %v2034 = vmul.f32 %v2026, %v2031
          %v2036 = vlaneseq
          %v2037 = vshrl.u32 %v2036, 7
          %v2038 = vsub.s32 0, %v2037
          %v2039 = vrot.slane %v2000, %v2038
          %v2041 = vadd.f32 %v2033, %v2039
          %v2042 = vadd.f32 %v2034, %v2039
          %v2043 = vld [vmem:[%s5] sm:$0xff]
          %v2044 = vld [vmem:[%s5 + $0x8] sm:$0xff]
          %v2045 = vld [vmem:[%s5 + $0x10] sm:$0xff]
          %v2046 = vld [vmem:[%s5 + $0x18] sm:$0xff]
          %v2047 = vld [vmem:[%s6] sm:$0x1]
          %v2049 = vlaneseq
          %v2050 = vshrl.u32 %v2049, 7
          %v2051 = vsub.s32 0, %v2050
          %v2052 = vrot.slane %v2047, %v2051
          %v2055 = vsel %vm874, %v2041, 0
          %v2058 = vsel %vm874, %v2042, 0
          %2060 = vmatprep.subr.mxu0 0.0
          %2061 = vmatpush1.msra.mxu0 %v2043
          %2062 = vmatprep.subr.mxu0 0.0
          %2063 = vmatpush1.msra.mxu0 %v2044
          %2064 = vmatprep.subr.mxu0 0.0
          %2065 = vmatpush1.msra.mxu0 %v2045
          %2066 = vmatprep.subr.mxu0 0.0
          %2067 = vmatpush1.msra.mxu0 %v2046
          %2068 = vmatprep.subr.mxu0 0.0
          %2069 = vmatpush1.msra.mxu0 0.0
          %2070 = vmatprep.subr.mxu0 0.0
          %2071 = vmatpush1.msra.mxu0 0.0
          %2072 = vmatprep.subr.mxu0 0.0
          %2073 = vmatpush1.msra.mxu0 0.0
          %2074 = vmatprep.subr.mxu0 0.0
          %2075 = vmatpush1.msra.mxu0 0.0
          %2076 = vmatprep.subr.mxu0 0.0
          %2077 = vmatpush1.msra.mxu0 0.0
          %2078 = vmatprep.subr.mxu0 0.0
          %2079 = vmatpush1.msra.mxu0 0.0
          %2080 = vmatprep.subr.mxu0 0.0
          %2081 = vmatpush1.msra.mxu0 0.0
          %2082 = vmatprep.subr.mxu0 0.0
          %2083 = vmatpush1.msra.mxu0 0.0
          %2084 = vmatprep.subr.mxu0 0.0
          %2085 = vmatpush1.msra.mxu0 0.0
          %2086 = vmatprep.subr.mxu0 0.0
          %2087 = vmatpush1.msra.mxu0 0.0
          %2088 = vmatprep.subr.mxu0 0.0
          %2089 = vmatpush1.msra.mxu0 0.0
          %2090 = vmatprep.subr.mxu0 0.0
          %2091 = vmatpush1.msra.mxu0 0.0
          %2092 = vmatprep.subr.mxu0 0.0
          %2093 = vmatpush1.msra.mxu0 0.0
          %2094 = vmatprep.subr.mxu0 0.0
          %2095 = vmatpush1.msra.mxu0 0.0
          %2096 = vmatprep.subr.mxu0 0.0
          %2097 = vmatpush1.msra.mxu0 0.0
          %2098 = vmatprep.subr.mxu0 0.0
          %2099 = vmatpush1.msra.mxu0 0.0
          %2100 = vmatprep.subr.mxu0 0.0
          %2101 = vmatpush1.msra.mxu0 0.0
          %2102 = vmatprep.subr.mxu0 0.0
          %2103 = vmatpush1.msra.mxu0 0.0
          %2104 = vmatprep.subr.mxu0 0.0
          %2105 = vmatpush1.msra.mxu0 0.0
          %2106 = vmatprep.subr.mxu0 0.0
          %2107 = vmatpush1.msra.mxu0 0.0
          %2108 = vmatprep.subr.mxu0 0.0
          %2109 = vmatpush1.msra.mxu0 0.0
          %2110 = vmatprep.subr.mxu0 0.0
          %2111 = vmatpush1.msra.mxu0 0.0
          %2112 = vmatprep.subr.mxu0 0.0
          %2113 = vmatpush1.msra.mxu0 0.0
          %2114 = vmatprep.subr.mxu0 0.0
          %2115 = vmatpush1.msra.mxu0 0.0
          %2116 = vmatprep.subr.mxu0 0.0
          %2117 = vmatpush1.msra.mxu0 0.0
          %2118 = vmatprep.subr.mxu0 0.0
          %2119 = vmatpush1.msra.mxu0 0.0
          %2120 = vmatprep.subr.mxu0 0.0
          %2121 = vmatpush1.msra.mxu0 0.0
          %2122 = vmatprep.subr.mxu0 0.0
          %2123 = vmatpush1.msra.mxu0 0.0
          %2124 = vmatprep.mubr.f32.mxu0 0.0
          %2125 = vmatmul.mubr.f32.gmra.mrb[0].mxu0 %v2055
          %v2126 = vpop.f32.mrb[0].mxu0
          %v2127 = vadd.f32 %v2052, %v2126
          %v2128 = vpop.f32.mrb[0].mxu0
          %2129 = vmatprep.mubr.f32.mxu0 0.0
          %2130 = vmatmul.mubr.f32.gmra.mrb[0].mxu0 %v2058
          %v2131 = vpop.f32.mrb[0].mxu0
          %v2132 = vadd.f32 %v2052, %v2131
          %v2133 = vpop.f32.mrb[0].mxu0
          %2134 = vdwg.mxu0
          %2135 = vst [vmem:[#allocation3] sm:$0xff] %v2127
          %2136 = vst [vmem:[#allocation3 + $0x8] sm:$0xff] %v2132
        $region112: #{tpu_custom_call.1} parent=103 // pred_fallthru
          _
        // Predicated region
        $region113: #{tpu_custom_call.1} parent=103 // pred_check
          %p2137 = pneg %p557
        $region114: #{tpu_custom_call.1} parent=103 // pred_check_branch
          %2139 = sbr.rel (%p2137) target = $region116
        $region115: #{tpu_custom_call.1} parent=103 // pred_region
          %s2141 = ssub.s32 256, 256
          %2142 = vsyncadd [#allocation4], %s2141
          %s2143 = sshll.u32 [#allocation3], 4
          %s2144 = int_to_ptr.vmem [resolvable:$true] %s2143
          %2149 = dma.vmem_to_hbm [thread:$0]  %s2144, 256, %s21, [#allocation4], 128, 128, 8
        $region116: #{tpu_custom_call.1} parent=103 // pred_fallthru
          _
        // Predicated region
        $region117: #{tpu_custom_call.1} parent=103 // pred_check
          %p2150 = pneg %p557
        $region118: #{tpu_custom_call.1} parent=103 // pred_check_branch
          %2152 = sbr.rel (%p2150) target = $region120
        $region119: #{tpu_custom_call.1} parent=103 // pred_region
          %2153 = dma.done [#allocation4], 256
        $region120: #{tpu_custom_call.1} parent=103 // pred_fallthru
          _
      $region104: #{tpu_custom_call.1} parent=5 // pred_fallthru
        _
      %p2154 = scmp.le.s32.totalorder 2, %s28
      // Predicated region
      $region121: #{tpu_custom_call.1} parent=5 // pred_check
        %p2155 = pneg %p2154
      $region122: #{tpu_custom_call.1} parent=5 // pred_check_branch
        %2157 = sbr.rel (%p2155) target = $region124
      $region123: #{tpu_custom_call.1} parent=5 // pred_region
        %s2158 = ssub.s32 %s28, 2
      $region124: #{tpu_custom_call.1} parent=5 // pred_fallthru
        _
    $region6: #{tpu_custom_call.1} parent=1 // loop_footer
      %s32 = sadd.s32 1, %s28
    $region7: #{tpu_custom_call.1} parent=1 // loop_footer_branch
      %27 = sbr.rel target = $region3
    $region8: #{tpu_custom_call.1} parent=1 // loop_exit
      _
    %2159 = vsyncpa [#allocation4], 1
    %s2160 = scalar_lea.sflag [#allocation4], 1
    %2161 = vsyncpa %s2160, 1

</llo_original>
